<compile_context>
chip_gen: v7x
topology: tpu7x:2x2x1
jax: 0.10.0
libtpu: 0.0.40
codegen_flags: <defaults>
</compile_context>

<pallas_src>
import functools

import numpy as np
import jax
import jax.numpy as jnp
from jax import lax
from jax.experimental import pallas as pl
from jax.experimental.pallas import tpu as pltpu


# ----------------------------- Pallas kernel ------------------------------- #

def depthconv_kernel(x_ref, m1_ref, sh1_ref, astack_ref, smask_ref, sh2_ref,
                     m3_ref, sh3_ref, o_ref, *, W):
    R = m1_ref.shape[0]
    P = x_ref.shape[-1]
    x = x_ref[0]                                             # (R, P)

    # DepthConv1: (7,1,1) conv (BN1 scale folded into m1) + shift + ReLU
    h1 = jnp.dot(m1_ref[...], x, preferred_element_type=jnp.float32)
    h1 = jnp.maximum(h1 + sh1_ref[...], 0.0)

    # conv1: depthwise 3x3x3 conv.  Depth/channel mixing of all 9 (kh,kw) taps
    # is one stacked MXU matmul; the spatial shift of each tap is a lane roll
    # combined with a precomputed border (zero-padding) mask.
    hstack = jnp.dot(astack_ref[...], h1,
                     preferred_element_type=jnp.float32)     # (9*R, P)
    acc = jnp.zeros_like(h1)
    for t in range(9):                                       # unrolled spatial taps
        kh, kw = t // 3, t % 3
        ds = (kh - 1) * W + (kw - 1)                         # lane offset of the tap
        blk = hstack[t * R:(t + 1) * R, :]                   # (R, P), static slice
        if ds != 0:
            # rolled[p] = blk[(p + ds) % P]; border mask kills wrapped lanes.
            blk = pltpu.roll(blk, shift=(-ds) % P, axis=1)
        acc = acc + blk * smask_ref[t]
    h2 = jnp.maximum(acc + sh2_ref[...], 0.0)

    # DepthConv2: (7,1,1) conv (BN3 scale folded into m3) + shift
    h3 = jnp.dot(m3_ref[...], h2, preferred_element_type=jnp.float32) + sh3_ref[...]

    # residual + final ReLU
    o_ref[0] = jnp.maximum(h3 + x, 0.0)


def depthconv_forward(x, params):
    """x: (N, C, D, H, W) float32."""
    N, C, D, H, W = x.shape
    R, P = C * D, H * W
    x2 = x.reshape(N, R, P)
    (M1, sh1, Astack, smask, sh2, M3, sh3) = params

    flops = N * (2 * R * R * P            # DepthConv1 matmul
                 + 2 * (9 * R) * R * P    # stacked depthwise matmul
                 + 2 * R * R * P          # DepthConv2 matmul
                 + 30 * R * P)            # rolls / masks / shifts / ReLU / residual
    bytes_accessed = 4 * (2 * N * R * P + 11 * R * R + 9 * P + 3 * R)

    out = pl.pallas_call(
        functools.partial(depthconv_kernel, W=W),
        out_shape=jax.ShapeDtypeStruct((N, R, P), jnp.float32),
        grid_spec=pltpu.PrefetchScalarGridSpec(
            num_scalar_prefetch=0,
            grid=(N,),
            in_specs=[
                pl.BlockSpec((1, R, P), lambda n: (n, 0, 0)),    # x
                pl.BlockSpec((R, R), lambda n: (0, 0)),          # M1 (BN1 scale folded)
                pl.BlockSpec((R, 1), lambda n: (0, 0)),          # shift1
                pl.BlockSpec((9 * R, R), lambda n: (0, 0)),      # stacked depthwise taps
                pl.BlockSpec((9, 1, P), lambda n: (0, 0, 0)),    # spatial border masks
                pl.BlockSpec((R, 1), lambda n: (0, 0)),          # shift2
                pl.BlockSpec((R, R), lambda n: (0, 0)),          # M3 (BN3 scale folded)
                pl.BlockSpec((R, 1), lambda n: (0, 0)),          # shift3
            ],
            out_specs=pl.BlockSpec((1, R, P), lambda n: (n, 0, 0)),
        ),
        compiler_params=pltpu.CompilerParams(
            dimension_semantics=("parallel",)),
        cost_estimate=pl.CostEstimate(
            flops=flops, transcendentals=0, bytes_accessed=bytes_accessed),
    )(x2, M1, sh1, Astack, smask, sh2, M3, sh3)
    return out.reshape(N, C, D, H, W)


# --------------------- host-side parameter construction -------------------- #

def depthconv_matrix(w, D, row_scale):
    """(7,1,1) conv (pad along D) + channel mix, BN scale folded -> (Co*D, Ci*D)."""
    Co, Ci, K = w.shape
    pad = (K - 1) // 2
    M = np.zeros((Co * D, Ci * D), np.float32)
    for o in range(Co):
        for i in range(Ci):
            for d_out in range(D):
                for kd in range(K):
                    d_in = d_out + kd - pad
                    if 0 <= d_in < D:
                        M[o * D + d_out, i * D + d_in] += w[o, i, kd]
    return M * row_scale.reshape(-1, 1)


def depthwise_astack(w2, D, ch_scale):
    """Depthwise 3x3x3: depth taps + BN scale folded, 9 (C*D, C*D) blocks stacked."""
    C = w2.shape[0]
    R = C * D
    A = np.zeros((9 * R, R), np.float32)
    for kh in range(3):
        for kw in range(3):
            t = kh * 3 + kw
            for c in range(C):
                for d_out in range(D):
                    for kd in range(3):
                        d_in = d_out + kd - 1
                        if 0 <= d_in < D:
                            A[t * R + c * D + d_out, c * D + d_in] += (
                                ch_scale[c] * w2[c, kd, kh, kw])
    return A


def spatial_masks(H, W):
    """9 per-lane 0/1 masks: output (h,w) keeps tap (kh,kw) iff the shifted read
    stays inside the HxW image (realizes the zero padding / kills roll wrap)."""
    M = np.zeros((9, 1, H * W), np.float32)
    for kh in range(3):
        for kw in range(3):
            t = kh * 3 + kw
            for h in range(H):
                for w in range(W):
                    if 0 <= h + kh - 1 < H and 0 <= w + kw - 1 < W:
                        M[t, 0, h * W + w] = 1.0
    return M


def bn_fold(gamma, beta, mean, var, D, eps=1e-5):
    """Eval-mode BN -> (per-row scale (R,), per-row shift (R,1), per-channel scale)."""
    scale = gamma / np.sqrt(var + eps)
    shift = beta - mean * scale
    return (np.repeat(scale, D).astype(np.float32),
            np.repeat(shift, D).astype(np.float32).reshape(-1, 1),
            scale.astype(np.float32))


# ------------------------------ pure-JAX reference ------------------------- #

def reference(x, w1, bn1, w2, bn2, w3, bn3, C):
    def conv3d(x, w, pad, groups=1):
        return lax.conv_general_dilated(
            x, w, (1, 1, 1), pad,
            dimension_numbers=("NCDHW", "OIDHW", "NCDHW"),
            feature_group_count=groups)

    def bn(y, p):
        gamma, beta, mean, var = p
        s = gamma / jnp.sqrt(var + 1e-5)
        return (y * s[None, :, None, None, None]
                + (beta - mean * s)[None, :, None, None, None])

    out1 = jax.nn.relu(bn(conv3d(x, w1[..., None, None],
                                 [(3, 3), (0, 0), (0, 0)]), bn1))
    out2 = jax.nn.relu(bn(conv3d(out1, w2[:, None],
                                 [(1, 1), (1, 1), (1, 1)], groups=C), bn2))
    out3 = bn(conv3d(out2, w3[..., None, None],
                     [(3, 3), (0, 0), (0, 0)]), bn3)
    return jax.nn.relu(out3 + x)


# ----------------------------------- main ----------------------------------- #

if __name__ == "__main__":
    N, C, D, H, W = 2, 4, 8, 16, 16   # inplanes = 4

    key = jax.random.PRNGKey(0)
    keys = jax.random.split(key, 8)
    x = jax.random.normal(keys[0], (N, C, D, H, W), jnp.float32)
    w1 = 0.2 * jax.random.normal(keys[1], (C, C, 7), jnp.float32)      # (7,1,1) conv
    w2 = 0.2 * jax.random.normal(keys[2], (C, 3, 3, 3), jnp.float32)   # depthwise 3x3x3
    w3 = 0.2 * jax.random.normal(keys[3], (C, C, 7), jnp.float32)      # (7,1,1) conv

    def bn_params(k):
        k1, k2, k3, k4 = jax.random.split(k, 4)
        gamma = 1.0 + 0.1 * jax.random.normal(k1, (C,), jnp.float32)
        beta = 0.1 * jax.random.normal(k2, (C,), jnp.float32)
        mean = 0.1 * jax.random.normal(k3, (C,), jnp.float32)
        var = 1.0 + 0.1 * jax.random.uniform(k4, (C,), jnp.float32)
        return gamma, beta, mean, var

    bn1, bn2, bn3 = bn_params(keys[4]), bn_params(keys[5]), bn_params(keys[6])

    # Host-side glue: fold convs + eval-mode BN into matrices / masks / shifts.
    w1n, w2n, w3n = np.asarray(w1), np.asarray(w2), np.asarray(w3)
    rs1, sh1, _ = bn_fold(*[np.asarray(t) for t in bn1], D)
    _, sh2, cs2 = bn_fold(*[np.asarray(t) for t in bn2], D)
    rs3, sh3, _ = bn_fold(*[np.asarray(t) for t in bn3], D)
    params = (jnp.asarray(depthconv_matrix(w1n, D, rs1)),
              jnp.asarray(sh1),
              jnp.asarray(depthwise_astack(w2n, D, cs2)),
              jnp.asarray(spatial_masks(H, W)),
              jnp.asarray(sh2),
              jnp.asarray(depthconv_matrix(w3n, D, rs3)),
              jnp.asarray(sh3))

    out = jax.block_until_ready(depthconv_forward(x, params))

    ref = jax.block_until_ready(reference(x, w1, bn1, w2, bn2, w3, bn3, C))
    np.testing.assert_allclose(np.asarray(out), np.asarray(ref),
                               rtol=2e-3, atol=2e-3)
    print("KERNEL_OK")
</pallas_src>

<mosaic_0001>
module attributes {stable_mosaic.version = 11 : i64} {
  func.func @depthconv_kernel(%arg0: i32, %arg1: memref<1x32x256xf32, #tpu.memory_space<vmem>>, %arg2: memref<32x32xf32, #tpu.memory_space<vmem>>, %arg3: memref<32x1xf32, #tpu.memory_space<vmem>>, %arg4: memref<288x32xf32, #tpu.memory_space<vmem>>, %arg5: memref<9x1x256xf32, #tpu.memory_space<vmem>>, %arg6: memref<32x1xf32, #tpu.memory_space<vmem>>, %arg7: memref<32x32xf32, #tpu.memory_space<vmem>>, %arg8: memref<32x1xf32, #tpu.memory_space<vmem>>, %arg9: memref<1x32x256xf32, #tpu.memory_space<vmem>>) attributes {dimension_semantics = [#tpu.dimension_semantics<parallel>], iteration_bounds = array<i64: 2>, scalar_prefetch = 0 : i64, scratch_operands = 0 : i64, tpu.core_type = #tpu.core_type<tc>, window_params = [{transform_indices = @transform_0, window_bounds = array<i64: 1, 32, 256>}, {pipeline_mode = #tpu.pipeline_mode<synchronous>, transform_indices = @transform_1, window_bounds = array<i64: 32, 32>}, {pipeline_mode = #tpu.pipeline_mode<synchronous>, transform_indices = @transform_2, window_bounds = array<i64: 32, 1>}, {pipeline_mode = #tpu.pipeline_mode<synchronous>, transform_indices = @transform_3, window_bounds = array<i64: 288, 32>}, {pipeline_mode = #tpu.pipeline_mode<synchronous>, transform_indices = @transform_4, window_bounds = array<i64: 9, 1, 256>}, {pipeline_mode = #tpu.pipeline_mode<synchronous>, transform_indices = @transform_5, window_bounds = array<i64: 32, 1>}, {pipeline_mode = #tpu.pipeline_mode<synchronous>, transform_indices = @transform_6, window_bounds = array<i64: 32, 32>}, {pipeline_mode = #tpu.pipeline_mode<synchronous>, transform_indices = @transform_7, window_bounds = array<i64: 32, 1>}, {transform_indices = @transform_8, window_bounds = array<i64: 1, 32, 256>}]} {
    %c0 = arith.constant 0 : index
    %c0_0 = arith.constant 0 : index
    %c0_1 = arith.constant 0 : index
    %0 = vector.load %arg1[%c0, %c0_0, %c0_1] : memref<1x32x256xf32, #tpu.memory_space<vmem>>, vector<1x32x256xf32>
    %1 = vector.shape_cast %0 : vector<1x32x256xf32> to vector<32x256xf32>
    %c0_2 = arith.constant 0 : index
    %c0_3 = arith.constant 0 : index
    %2 = vector.load %arg2[%c0_2, %c0_3] : memref<32x32xf32, #tpu.memory_space<vmem>>, vector<32x32xf32>
    %cst = arith.constant dense<0.000000e+00> : vector<32x256xf32>
    %3 = tpu.matmul %2, %1, %cst {dimension_numbers = #tpu.dot_dimension_numbers<[1], [0], [0], [1], [0, 0, 1, 1], [], []>} : vector<32x32xf32>, vector<32x256xf32>, vector<32x256xf32> -> vector<32x256xf32>
    %c0_4 = arith.constant 0 : index
    %c0_5 = arith.constant 0 : index
    %4 = vector.load %arg3[%c0_4, %c0_5] : memref<32x1xf32, #tpu.memory_space<vmem>>, vector<32x1xf32>
    %5 = vector.broadcast %4 : vector<32x1xf32> to vector<32x256xf32>
    %6 = arith.addf %3, %5 : vector<32x256xf32>
    %cst_6 = arith.constant 0.000000e+00 : f32
    %7 = vector.broadcast %cst_6 : f32 to vector<32x256xf32>
    %8 = arith.maximumf %6, %7 : vector<32x256xf32>
    %c0_7 = arith.constant 0 : index
    %c0_8 = arith.constant 0 : index
    %9 = vector.load %arg4[%c0_7, %c0_8] : memref<288x32xf32, #tpu.memory_space<vmem>>, vector<288x32xf32>
    %cst_9 = arith.constant dense<0.000000e+00> : vector<288x256xf32>
    %10 = tpu.matmul %9, %8, %cst_9 {dimension_numbers = #tpu.dot_dimension_numbers<[1], [0], [0], [1], [0, 0, 1, 1], [], []>} : vector<288x32xf32>, vector<32x256xf32>, vector<288x256xf32> -> vector<288x256xf32>
    %cst_10 = arith.constant 0.000000e+00 : f32
    %11 = vector.broadcast %cst_10 : f32 to vector<32x256xf32>
    %12 = vector.extract_strided_slice %10 {offsets = [0, 0], sizes = [32, 256], strides = [1, 1]} : vector<288x256xf32> to vector<32x256xf32>
    %c17_i32 = arith.constant 17 : i32
    %13 = tpu.dynamic_rotate %12 by %c17_i32 dim 1 : vector<32x256xf32>, i32 -> vector<32x256xf32>
    %c0_11 = arith.constant 0 : index
    %c0_12 = arith.constant 0 : index
    %c0_13 = arith.constant 0 : index
    %14 = vector.load %arg5[%c0_11, %c0_12, %c0_13] : memref<9x1x256xf32, #tpu.memory_space<vmem>>, vector<1x1x256xf32>
    %15 = vector.shape_cast %14 : vector<1x1x256xf32> to vector<1x256xf32>
    %16 = vector.broadcast %15 : vector<1x256xf32> to vector<32x256xf32>
    %17 = arith.mulf %13, %16 : vector<32x256xf32>
    %18 = arith.addf %11, %17 : vector<32x256xf32>
    %19 = vector.extract_strided_slice %10 {offsets = [32, 0], sizes = [32, 256], strides = [1, 1]} : vector<288x256xf32> to vector<32x256xf32>
    %c16_i32 = arith.constant 16 : i32
    %20 = tpu.dynamic_rotate %19 by %c16_i32 dim 1 : vector<32x256xf32>, i32 -> vector<32x256xf32>
    %c1 = arith.constant 1 : index
    %c0_14 = arith.constant 0 : index
    %c0_15 = arith.constant 0 : index
    %21 = vector.load %arg5[%c1, %c0_14, %c0_15] : memref<9x1x256xf32, #tpu.memory_space<vmem>>, vector<1x1x256xf32>
    %22 = vector.shape_cast %21 : vector<1x1x256xf32> to vector<1x256xf32>
    %23 = vector.broadcast %22 : vector<1x256xf32> to vector<32x256xf32>
    %24 = arith.mulf %20, %23 : vector<32x256xf32>
    %25 = arith.addf %18, %24 : vector<32x256xf32>
    %26 = vector.extract_strided_slice %10 {offsets = [64, 0], sizes = [32, 256], strides = [1, 1]} : vector<288x256xf32> to vector<32x256xf32>
    %c15_i32 = arith.constant 15 : i32
    %27 = tpu.dynamic_rotate %26 by %c15_i32 dim 1 : vector<32x256xf32>, i32 -> vector<32x256xf32>
    %c2 = arith.constant 2 : index
    %c0_16 = arith.constant 0 : index
    %c0_17 = arith.constant 0 : index
    %28 = vector.load %arg5[%c2, %c0_16, %c0_17] : memref<9x1x256xf32, #tpu.memory_space<vmem>>, vector<1x1x256xf32>
    %29 = vector.shape_cast %28 : vector<1x1x256xf32> to vector<1x256xf32>
    %30 = vector.broadcast %29 : vector<1x256xf32> to vector<32x256xf32>
    %31 = arith.mulf %27, %30 : vector<32x256xf32>
    %32 = arith.addf %25, %31 : vector<32x256xf32>
    %33 = vector.extract_strided_slice %10 {offsets = [96, 0], sizes = [32, 256], strides = [1, 1]} : vector<288x256xf32> to vector<32x256xf32>
    %c1_i32 = arith.constant 1 : i32
    %34 = tpu.dynamic_rotate %33 by %c1_i32 dim 1 : vector<32x256xf32>, i32 -> vector<32x256xf32>
    %c3 = arith.constant 3 : index
    %c0_18 = arith.constant 0 : index
    %c0_19 = arith.constant 0 : index
    %35 = vector.load %arg5[%c3, %c0_18, %c0_19] : memref<9x1x256xf32, #tpu.memory_space<vmem>>, vector<1x1x256xf32>
    %36 = vector.shape_cast %35 : vector<1x1x256xf32> to vector<1x256xf32>
    %37 = vector.broadcast %36 : vector<1x256xf32> to vector<32x256xf32>
    %38 = arith.mulf %34, %37 : vector<32x256xf32>
    %39 = arith.addf %32, %38 : vector<32x256xf32>
    %40 = vector.extract_strided_slice %10 {offsets = [128, 0], sizes = [32, 256], strides = [1, 1]} : vector<288x256xf32> to vector<32x256xf32>
    %c4 = arith.constant 4 : index
    %c0_20 = arith.constant 0 : index
    %c0_21 = arith.constant 0 : index
    %41 = vector.load %arg5[%c4, %c0_20, %c0_21] : memref<9x1x256xf32, #tpu.memory_space<vmem>>, vector<1x1x256xf32>
    %42 = vector.shape_cast %41 : vector<1x1x256xf32> to vector<1x256xf32>
    %43 = vector.broadcast %42 : vector<1x256xf32> to vector<32x256xf32>
    %44 = arith.mulf %40, %43 : vector<32x256xf32>
    %45 = arith.addf %39, %44 : vector<32x256xf32>
    %46 = vector.extract_strided_slice %10 {offsets = [160, 0], sizes = [32, 256], strides = [1, 1]} : vector<288x256xf32> to vector<32x256xf32>
    %c255_i32 = arith.constant 255 : i32
    %47 = tpu.dynamic_rotate %46 by %c255_i32 dim 1 : vector<32x256xf32>, i32 -> vector<32x256xf32>
    %c5 = arith.constant 5 : index
    %c0_22 = arith.constant 0 : index
    %c0_23 = arith.constant 0 : index
    %48 = vector.load %arg5[%c5, %c0_22, %c0_23] : memref<9x1x256xf32, #tpu.memory_space<vmem>>, vector<1x1x256xf32>
    %49 = vector.shape_cast %48 : vector<1x1x256xf32> to vector<1x256xf32>
    %50 = vector.broadcast %49 : vector<1x256xf32> to vector<32x256xf32>
    %51 = arith.mulf %47, %50 : vector<32x256xf32>
    %52 = arith.addf %45, %51 : vector<32x256xf32>
    %53 = vector.extract_strided_slice %10 {offsets = [192, 0], sizes = [32, 256], strides = [1, 1]} : vector<288x256xf32> to vector<32x256xf32>
    %c241_i32 = arith.constant 241 : i32
    %54 = tpu.dynamic_rotate %53 by %c241_i32 dim 1 : vector<32x256xf32>, i32 -> vector<32x256xf32>
    %c6 = arith.constant 6 : index
    %c0_24 = arith.constant 0 : index
    %c0_25 = arith.constant 0 : index
    %55 = vector.load %arg5[%c6, %c0_24, %c0_25] : memref<9x1x256xf32, #tpu.memory_space<vmem>>, vector<1x1x256xf32>
    %56 = vector.shape_cast %55 : vector<1x1x256xf32> to vector<1x256xf32>
    %57 = vector.broadcast %56 : vector<1x256xf32> to vector<32x256xf32>
    %58 = arith.mulf %54, %57 : vector<32x256xf32>
    %59 = arith.addf %52, %58 : vector<32x256xf32>
    %60 = vector.extract_strided_slice %10 {offsets = [224, 0], sizes = [32, 256], strides = [1, 1]} : vector<288x256xf32> to vector<32x256xf32>
    %c240_i32 = arith.constant 240 : i32
    %61 = tpu.dynamic_rotate %60 by %c240_i32 dim 1 : vector<32x256xf32>, i32 -> vector<32x256xf32>
    %c7 = arith.constant 7 : index
    %c0_26 = arith.constant 0 : index
    %c0_27 = arith.constant 0 : index
    %62 = vector.load %arg5[%c7, %c0_26, %c0_27] : memref<9x1x256xf32, #tpu.memory_space<vmem>>, vector<1x1x256xf32>
    %63 = vector.shape_cast %62 : vector<1x1x256xf32> to vector<1x256xf32>
    %64 = vector.broadcast %63 : vector<1x256xf32> to vector<32x256xf32>
    %65 = arith.mulf %61, %64 : vector<32x256xf32>
    %66 = arith.addf %59, %65 : vector<32x256xf32>
    %67 = vector.extract_strided_slice %10 {offsets = [256, 0], sizes = [32, 256], strides = [1, 1]} : vector<288x256xf32> to vector<32x256xf32>
    %c239_i32 = arith.constant 239 : i32
    %68 = tpu.dynamic_rotate %67 by %c239_i32 dim 1 : vector<32x256xf32>, i32 -> vector<32x256xf32>
    %c8 = arith.constant 8 : index
    %c0_28 = arith.constant 0 : index
    %c0_29 = arith.constant 0 : index
    %69 = vector.load %arg5[%c8, %c0_28, %c0_29] : memref<9x1x256xf32, #tpu.memory_space<vmem>>, vector<1x1x256xf32>
    %70 = vector.shape_cast %69 : vector<1x1x256xf32> to vector<1x256xf32>
    %71 = vector.broadcast %70 : vector<1x256xf32> to vector<32x256xf32>
    %72 = arith.mulf %68, %71 : vector<32x256xf32>
    %73 = arith.addf %66, %72 : vector<32x256xf32>
    %c0_30 = arith.constant 0 : index
    %c0_31 = arith.constant 0 : index
    %74 = vector.load %arg6[%c0_30, %c0_31] : memref<32x1xf32, #tpu.memory_space<vmem>>, vector<32x1xf32>
    %75 = vector.broadcast %74 : vector<32x1xf32> to vector<32x256xf32>
    %76 = arith.addf %73, %75 : vector<32x256xf32>
    %cst_32 = arith.constant 0.000000e+00 : f32
    %77 = vector.broadcast %cst_32 : f32 to vector<32x256xf32>
    %78 = arith.maximumf %76, %77 : vector<32x256xf32>
    %c0_33 = arith.constant 0 : index
    %c0_34 = arith.constant 0 : index
    %79 = vector.load %arg7[%c0_33, %c0_34] : memref<32x32xf32, #tpu.memory_space<vmem>>, vector<32x32xf32>
    %cst_35 = arith.constant dense<0.000000e+00> : vector<32x256xf32>
    %80 = tpu.matmul %79, %78, %cst_35 {dimension_numbers = #tpu.dot_dimension_numbers<[1], [0], [0], [1], [0, 0, 1, 1], [], []>} : vector<32x32xf32>, vector<32x256xf32>, vector<32x256xf32> -> vector<32x256xf32>
    %c0_36 = arith.constant 0 : index
    %c0_37 = arith.constant 0 : index
    %81 = vector.load %arg8[%c0_36, %c0_37] : memref<32x1xf32, #tpu.memory_space<vmem>>, vector<32x1xf32>
    %82 = vector.broadcast %81 : vector<32x1xf32> to vector<32x256xf32>
    %83 = arith.addf %80, %82 : vector<32x256xf32>
    %84 = arith.addf %83, %1 : vector<32x256xf32>
    %cst_38 = arith.constant 0.000000e+00 : f32
    %85 = vector.broadcast %cst_38 : f32 to vector<32x256xf32>
    %86 = arith.maximumf %84, %85 : vector<32x256xf32>
    %c0_39 = arith.constant 0 : index
    %c0_40 = arith.constant 0 : index
    %c0_41 = arith.constant 0 : index
    %87 = vector.load %arg9[%c0_39, %c0_40, %c0_41] : memref<1x32x256xf32, #tpu.memory_space<vmem>>, vector<1x32x256xf32>
    %88 = vector.shape_cast %87 : vector<1x32x256xf32> to vector<32x256xf32>
    %89 = vector.shape_cast %86 : vector<32x256xf32> to vector<1x32x256xf32>
    tpu.vector_store %arg9[%c0_39, %c0_40, %c0_41], %89 {strides = array<i32>} : memref<1x32x256xf32, #tpu.memory_space<vmem>>, vector<1x32x256xf32>,
    return
  }
  func.func @transform_0(%arg0: i32) -> (i32, i32, i32) {
    %c0_i32 = arith.constant 0 : i32
    %c0_i32_0 = arith.constant 0 : i32
    %c0_i32_1 = arith.constant 0 : i32
    return %arg0, %c0_i32, %c0_i32_0 : i32, i32, i32
  }
  func.func @transform_1(%arg0: i32) -> (i32, i32) {
    %c0_i32 = arith.constant 0 : i32
    %c0_i32_0 = arith.constant 0 : i32
    %c0_i32_1 = arith.constant 0 : i32
    return %c0_i32, %c0_i32_0 : i32, i32
  }
  func.func @transform_2(%arg0: i32) -> (i32, i32) {
    %c0_i32 = arith.constant 0 : i32
    %c0_i32_0 = arith.constant 0 : i32
    %c0_i32_1 = arith.constant 0 : i32
    return %c0_i32, %c0_i32_0 : i32, i32
  }
  func.func @transform_3(%arg0: i32) -> (i32, i32) {
    %c0_i32 = arith.constant 0 : i32
    %c0_i32_0 = arith.constant 0 : i32
    %c0_i32_1 = arith.constant 0 : i32
    return %c0_i32, %c0_i32_0 : i32, i32
  }
  func.func @transform_4(%arg0: i32) -> (i32, i32, i32) {
    %c0_i32 = arith.constant 0 : i32
    %c0_i32_0 = arith.constant 0 : i32
    %c0_i32_1 = arith.constant 0 : i32
    %c0_i32_2 = arith.constant 0 : i32
    return %c0_i32, %c0_i32_0, %c0_i32_1 : i32, i32, i32
  }
  func.func @transform_5(%arg0: i32) -> (i32, i32) {
    %c0_i32 = arith.constant 0 : i32
    %c0_i32_0 = arith.constant 0 : i32
    %c0_i32_1 = arith.constant 0 : i32
    return %c0_i32, %c0_i32_0 : i32, i32
  }
  func.func @transform_6(%arg0: i32) -> (i32, i32) {
    %c0_i32 = arith.constant 0 : i32
    %c0_i32_0 = arith.constant 0 : i32
    %c0_i32_1 = arith.constant 0 : i32
    return %c0_i32, %c0_i32_0 : i32, i32
  }
  func.func @transform_7(%arg0: i32) -> (i32, i32) {
    %c0_i32 = arith.constant 0 : i32
    %c0_i32_0 = arith.constant 0 : i32
    %c0_i32_1 = arith.constant 0 : i32
    return %c0_i32, %c0_i32_0 : i32, i32
  }
  func.func @transform_8(%arg0: i32) -> (i32, i32, i32) {
    %c0_i32 = arith.constant 0 : i32
    %c0_i32_0 = arith.constant 0 : i32
    %c0_i32_1 = arith.constant 0 : i32
    return %arg0, %c0_i32, %c0_i32_0 : i32, i32, i32
  }
}

</mosaic_0001>

<llo_original>
// kernel: tpu_custom_call.1
$region0: #{tpu_custom_call.1}
  #allocation0 [shape = 'u32[]', space=smem, size = 0x4, offset = 0x4, fixed_abs, tag = 'smem constant byte address 0x4 - core index']
  #allocation1 [shape = 'u32[144,128]{1,0:T(1,128)}', space=vmem, size = 0x12000, scoped, tag = 'internal scratch']
  %s0 = inlined_call_operand.vmem [shape: f32[2,32,256], index: 0, kind: input, shape index: {}]
  %s1 = inlined_call_operand.vmem [shape: f32[32,32], index: 1, kind: input, shape index: {}]
  %s2 = inlined_call_operand.vmem [shape: f32[32,1], index: 2, kind: input, shape index: {}]
  %s3 = inlined_call_operand.vmem [shape: f32[288,32], index: 3, kind: input, shape index: {}]
  %s4 = inlined_call_operand.vmem [shape: f32[9,1,256], index: 4, kind: input, shape index: {}]
  %s5 = inlined_call_operand.vmem [shape: f32[32,1], index: 5, kind: input, shape index: {}]
  %s6 = inlined_call_operand.vmem [shape: f32[32,32], index: 6, kind: input, shape index: {}]
  %s7 = inlined_call_operand.vmem [shape: f32[32,1], index: 7, kind: input, shape index: {}]
  %s8 = inlined_call_operand.hbm [shape: f32[2,32,256], index: 8, kind: output, shape index: {}]
  %s9 = sld [smem:[#allocation0]]
  $region65: #{tpu_custom_call.1} parent=0
    _
  %s11 = ssub.s32 1, %s9
  %s12 = scalar_select 0, %s11, %s9
  $region1: #{tpu_custom_call.1} parent=0
    #allocation2 [shape = 'u8[65536]{0}', space=vmem, size = 0x10000, scoped, tag = 'output window, operand 0']
    #allocation3 [shape = 's32[2]{0}', space=sflag, size = 0x8, scoped, tag = 'scoped memory for tpu_custom_call.1']
    %13 = vsyncpa [#allocation3], 0
    %s14 = scalar_lea.sflag [#allocation3], 1
    %15 = vsyncpa %s14, 0
    loop: start=0, step=1, limit=4
    $region2: #{tpu_custom_call.1} parent=1 // loop_pre_header
      _
    $region3: #{tpu_custom_call.1} parent=1 // loop_header
      %s17 = sphi 0, %s21
      %p18 = scmp.ge.s32.totalorder %s17, 4
      %s27 = sphi 0, %s29
      %s30 = sphi 0, %s27
      %s31 = sphi 0, %s30
      %s47 = sphi 0, %s31
      %s51 = sphi 0, %s51
      %s53 = sphi 0, %s51
      %s54 = sphi 0, %s53
      %s68 = sphi 0, %s54
      %s72 = sphi 0, %s72
      %s74 = sphi 0, %s72
      %s75 = sphi 0, %s74
      %s89 = sphi 0, %s75
      %s93 = sphi 0, %s93
      %s95 = sphi 0, %s93
      %s96 = sphi 0, %s95
      %s110 = sphi 0, %s96
      %s114 = sphi 0, %s114
      %s116 = sphi 0, %s114
      %s117 = sphi 0, %s116
      %s131 = sphi 0, %s117
      %s135 = sphi 0, %s135
      %s137 = sphi 0, %s135
      %s138 = sphi 0, %s137
      %s152 = sphi 0, %s138
      %s156 = sphi 0, %s156
      %s158 = sphi 0, %s156
      %s159 = sphi 0, %s158
      %s173 = sphi 0, %s159
      %s177 = sphi 0, %s177
      %s179 = sphi 0, %s177
      %s180 = sphi 0, %s179
      %s194 = sphi 0, %s180
      %s200 = sphi 0, %s202
      %s203 = sphi 0, %s200
      %s204 = sphi 0, %s203
      %s220 = sphi 0, %s204
    $region4: #{tpu_custom_call.1} parent=1 // loop_header_branch
      %20 = sbr.rel (%p18) target = $region8
    $region5: #{tpu_custom_call.1} parent=1 // loop_body
      %s22 = ssub.s32 %s17, 1
      %s23 = ssub.s32 %s17, 2
      %s24 = sadd.s32 %s17, 1
      %s25 = ssub.s32 %s17, %s24
      %p26 = scmp.eq.s32.totalorder %s25, 0
      %s28 = sadd.s32 %s27, 1
      %s29 = scalar_select %p26, %s27, %s28
      %p32 = pneg %p26
      %p33 = scmp.eq.s32.totalorder %s17, 1
      %p34 = por %p32, %p33
      %p35 = scmp.ne.s32.totalorder %s27, %s30
      %p36 = scmp.eq.s32.totalorder %s17, 0
      %p37 = por %p35, %p36
      %p38 = scmp.ne.s32.totalorder %s27, %s30
      %p39 = scmp.eq.s32.totalorder %s22, 1
      %p40 = por %p38, %p39
      %p41 = scmp.ne.s32.totalorder %s30, %s31
      %p42 = scmp.eq.s32.totalorder %s22, 0
      %p43 = por %p41, %p42
      %p44 = scmp.ne.s32.totalorder %s30, %s31
      %p45 = scmp.eq.s32.totalorder %s23, 1
      %p46 = por %p44, %p45
      %p48 = scmp.ne.s32.totalorder %s31, %s47
      %p49 = scmp.eq.s32.totalorder %s23, 0
      %p50 = por %p48, %p49
      %s52 = sadd.s32 %s51, 1
      %p55 = scmp.eq.s32.totalorder %s17, 1
      %p56 = scmp.ne.s32.totalorder %s51, %s53
      %p57 = scmp.eq.s32.totalorder %s17, 0
      %p58 = por %p56, %p57
      %p59 = scmp.ne.s32.totalorder %s51, %s53
      %p60 = scmp.eq.s32.totalorder %s22, 1
      %p61 = por %p59, %p60
      %p62 = scmp.ne.s32.totalorder %s53, %s54
      %p63 = scmp.eq.s32.totalorder %s22, 0
      %p64 = por %p62, %p63
      %p65 = scmp.ne.s32.totalorder %s53, %s54
      %p66 = scmp.eq.s32.totalorder %s23, 1
      %p67 = por %p65, %p66
      %p69 = scmp.ne.s32.totalorder %s54, %s68
      %p70 = scmp.eq.s32.totalorder %s23, 0
      %p71 = por %p69, %p70
      %s73 = sadd.s32 %s72, 1
      %p76 = scmp.eq.s32.totalorder %s17, 1
      %p77 = scmp.ne.s32.totalorder %s72, %s74
      %p78 = scmp.eq.s32.totalorder %s17, 0
      %p79 = por %p77, %p78
      %p80 = scmp.ne.s32.totalorder %s72, %s74
      %p81 = scmp.eq.s32.totalorder %s22, 1
      %p82 = por %p80, %p81
      %p83 = scmp.ne.s32.totalorder %s74, %s75
      %p84 = scmp.eq.s32.totalorder %s22, 0
      %p85 = por %p83, %p84
      %p86 = scmp.ne.s32.totalorder %s74, %s75
      %p87 = scmp.eq.s32.totalorder %s23, 1
      %p88 = por %p86, %p87
      %p90 = scmp.ne.s32.totalorder %s75, %s89
      %p91 = scmp.eq.s32.totalorder %s23, 0
      %p92 = por %p90, %p91
      %s94 = sadd.s32 %s93, 1
      %p97 = scmp.eq.s32.totalorder %s17, 1
      %p98 = scmp.ne.s32.totalorder %s93, %s95
      %p99 = scmp.eq.s32.totalorder %s17, 0
      %p100 = por %p98, %p99
      %p101 = scmp.ne.s32.totalorder %s93, %s95
      %p102 = scmp.eq.s32.totalorder %s22, 1
      %p103 = por %p101, %p102
      %p104 = scmp.ne.s32.totalorder %s95, %s96
      %p105 = scmp.eq.s32.totalorder %s22, 0
      %p106 = por %p104, %p105
      %p107 = scmp.ne.s32.totalorder %s95, %s96
      %p108 = scmp.eq.s32.totalorder %s23, 1
      %p109 = por %p107, %p108
      %p111 = scmp.ne.s32.totalorder %s96, %s110
      %p112 = scmp.eq.s32.totalorder %s23, 0
      %p113 = por %p111, %p112
      %s115 = sadd.s32 %s114, 1
      %p118 = scmp.eq.s32.totalorder %s17, 1
      %p119 = scmp.ne.s32.totalorder %s114, %s116
      %p120 = scmp.eq.s32.totalorder %s17, 0
      %p121 = por %p119, %p120
      %p122 = scmp.ne.s32.totalorder %s114, %s116
      %p123 = scmp.eq.s32.totalorder %s22, 1
      %p124 = por %p122, %p123
      %p125 = scmp.ne.s32.totalorder %s116, %s117
      %p126 = scmp.eq.s32.totalorder %s22, 0
      %p127 = por %p125, %p126
      %p128 = scmp.ne.s32.totalorder %s116, %s117
      %p129 = scmp.eq.s32.totalorder %s23, 1
      %p130 = por %p128, %p129
      %p132 = scmp.ne.s32.totalorder %s117, %s131
      %p133 = scmp.eq.s32.totalorder %s23, 0
      %p134 = por %p132, %p133
      %s136 = sadd.s32 %s135, 1
      %p139 = scmp.eq.s32.totalorder %s17, 1
      %p140 = scmp.ne.s32.totalorder %s135, %s137
      %p141 = scmp.eq.s32.totalorder %s17, 0
      %p142 = por %p140, %p141
      %p143 = scmp.ne.s32.totalorder %s135, %s137
      %p144 = scmp.eq.s32.totalorder %s22, 1
      %p145 = por %p143, %p144
      %p146 = scmp.ne.s32.totalorder %s137, %s138
      %p147 = scmp.eq.s32.totalorder %s22, 0
      %p148 = por %p146, %p147
      %p149 = scmp.ne.s32.totalorder %s137, %s138
      %p150 = scmp.eq.s32.totalorder %s23, 1
      %p151 = por %p149, %p150
      %p153 = scmp.ne.s32.totalorder %s138, %s152
      %p154 = scmp.eq.s32.totalorder %s23, 0
      %p155 = por %p153, %p154
      %s157 = sadd.s32 %s156, 1
      %p160 = scmp.eq.s32.totalorder %s17, 1
      %p161 = scmp.ne.s32.totalorder %s156, %s158
      %p162 = scmp.eq.s32.totalorder %s17, 0
      %p163 = por %p161, %p162
      %p164 = scmp.ne.s32.totalorder %s156, %s158
      %p165 = scmp.eq.s32.totalorder %s22, 1
      %p166 = por %p164, %p165
      %p167 = scmp.ne.s32.totalorder %s158, %s159
      %p168 = scmp.eq.s32.totalorder %s22, 0
      %p169 = por %p167, %p168
      %p170 = scmp.ne.s32.totalorder %s158, %s159
      %p171 = scmp.eq.s32.totalorder %s23, 1
      %p172 = por %p170, %p171
      %p174 = scmp.ne.s32.totalorder %s159, %s173
      %p175 = scmp.eq.s32.totalorder %s23, 0
      %p176 = por %p174, %p175
      %s178 = sadd.s32 %s177, 1
      %p181 = scmp.eq.s32.totalorder %s17, 1
      %p182 = scmp.ne.s32.totalorder %s177, %s179
      %p183 = scmp.eq.s32.totalorder %s17, 0
      %p184 = por %p182, %p183
      %p185 = scmp.ne.s32.totalorder %s177, %s179
      %p186 = scmp.eq.s32.totalorder %s22, 1
      %p187 = por %p185, %p186
      %p188 = scmp.ne.s32.totalorder %s179, %s180
      %p189 = scmp.eq.s32.totalorder %s22, 0
      %p190 = por %p188, %p189
      %p191 = scmp.ne.s32.totalorder %s179, %s180
      %p192 = scmp.eq.s32.totalorder %s23, 1
      %p193 = por %p191, %p192
      %p195 = scmp.ne.s32.totalorder %s180, %s194
      %p196 = scmp.eq.s32.totalorder %s23, 0
      %p197 = por %p195, %p196
      %s198 = ssub.s32 %s17, %s24
      %p199 = scmp.eq.s32.totalorder %s198, 0
      %s201 = sadd.s32 %s200, 1
      %s202 = scalar_select %p199, %s200, %s201
      %p205 = pneg %p199
      %p206 = scmp.eq.s32.totalorder %s17, 1
      %p207 = por %p205, %p206
      %p208 = scmp.ne.s32.totalorder %s200, %s203
      %p209 = scmp.eq.s32.totalorder %s17, 0
      %p210 = por %p208, %p209
      %p211 = scmp.ne.s32.totalorder %s200, %s203
      %p212 = scmp.eq.s32.totalorder %s22, 1
      %p213 = por %p211, %p212
      %p214 = scmp.ne.s32.totalorder %s203, %s204
      %p215 = scmp.eq.s32.totalorder %s22, 0
      %p216 = por %p214, %p215
      %p217 = scmp.ne.s32.totalorder %s203, %s204
      %p218 = scmp.eq.s32.totalorder %s23, 1
      %p219 = por %p217, %p218
      %p221 = scmp.ne.s32.totalorder %s204, %s220
      %p222 = scmp.eq.s32.totalorder %s23, 0
      %p223 = por %p221, %p222
      %p224 = scmp.le.s32.totalorder 1, %s17
      %p225 = scmp.lt.s32.totalorder %s17, 3
      %p226 = pnand %p224, %p225
      %p227 = pneg %p226
      // Predicated region
      $region9: #{tpu_custom_call.1} parent=5 // pred_check
        _
      $region10: #{tpu_custom_call.1} parent=5 // pred_check_branch
        %229 = sbr.rel (%p226) target = $region12
      $region11: #{tpu_custom_call.1} parent=5 // pred_region
        %s230 = ssub.s32 %s17, 1
        // Predicated region
        $region13: #{tpu_custom_call.1} parent=11 // pred_check
          %p231 = pneg %p64
        $region14: #{tpu_custom_call.1} parent=11 // pred_check_branch
          %233 = sbr.rel (%p231) target = $region16
        $region15: #{tpu_custom_call.1} parent=11 // pred_region
          _
        $region16: #{tpu_custom_call.1} parent=11 // pred_fallthru
          _
        // Predicated region
        $region17: #{tpu_custom_call.1} parent=11 // pred_check
          %p234 = pneg %p85
        $region18: #{tpu_custom_call.1} parent=11 // pred_check_branch
          %236 = sbr.rel (%p234) target = $region20
        $region19: #{tpu_custom_call.1} parent=11 // pred_region
          _
        $region20: #{tpu_custom_call.1} parent=11 // pred_fallthru
          _
        // Predicated region
        $region21: #{tpu_custom_call.1} parent=11 // pred_check
          %p237 = pneg %p106
        $region22: #{tpu_custom_call.1} parent=11 // pred_check_branch
          %239 = sbr.rel (%p237) target = $region24
        $region23: #{tpu_custom_call.1} parent=11 // pred_region
          _
        $region24: #{tpu_custom_call.1} parent=11 // pred_fallthru
          _
        // Predicated region
        $region25: #{tpu_custom_call.1} parent=11 // pred_check
          %p240 = pneg %p127
        $region26: #{tpu_custom_call.1} parent=11 // pred_check_branch
          %242 = sbr.rel (%p240) target = $region28
        $region27: #{tpu_custom_call.1} parent=11 // pred_region
          _
        $region28: #{tpu_custom_call.1} parent=11 // pred_fallthru
          _
        // Predicated region
        $region29: #{tpu_custom_call.1} parent=11 // pred_check
          %p243 = pneg %p148
        $region30: #{tpu_custom_call.1} parent=11 // pred_check_branch
          %245 = sbr.rel (%p243) target = $region32
        $region31: #{tpu_custom_call.1} parent=11 // pred_region
          _
        $region32: #{tpu_custom_call.1} parent=11 // pred_fallthru
          _
        // Predicated region
        $region33: #{tpu_custom_call.1} parent=11 // pred_check
          %p246 = pneg %p169
        $region34: #{tpu_custom_call.1} parent=11 // pred_check_branch
          %248 = sbr.rel (%p246) target = $region36
        $region35: #{tpu_custom_call.1} parent=11 // pred_region
          _
        $region36: #{tpu_custom_call.1} parent=11 // pred_fallthru
          _
        // Predicated region
        $region37: #{tpu_custom_call.1} parent=11 // pred_check
          %p249 = pneg %p190
        $region38: #{tpu_custom_call.1} parent=11 // pred_check_branch
          %251 = sbr.rel (%p249) target = $region40
        $region39: #{tpu_custom_call.1} parent=11 // pred_region
          _
        $region40: #{tpu_custom_call.1} parent=11 // pred_fallthru
          _
      $region12: #{tpu_custom_call.1} parent=5 // pred_fallthru
        _
      %p252 = scmp.lt.s32.totalorder %s17, 2
      // Predicated region
      $region41: #{tpu_custom_call.1} parent=5 // pred_check
        %p253 = pneg %p252
      $region42: #{tpu_custom_call.1} parent=5 // pred_check_branch
        %255 = sbr.rel (%p253) target = $region44
      $region43: #{tpu_custom_call.1} parent=5 // pred_region
        // Predicated region
        $region45: #{tpu_custom_call.1} parent=43 // pred_check
          %p256 = pneg %p37
        $region46: #{tpu_custom_call.1} parent=43 // pred_check_branch
          %258 = sbr.rel (%p256) target = $region48
        $region47: #{tpu_custom_call.1} parent=43 // pred_region
          %p259 = scmp.lt.s32.totalorder %s17, 1
          %s260 = scalar_select %p259, %s17, 1
          %s261 = smul.addr %s260, 8
          %s262 = smul.addr %s261, 8
          %s263 = scalar_lea.vmem %s0, %s262
        $region48: #{tpu_custom_call.1} parent=43 // pred_fallthru
          _
      $region44: #{tpu_custom_call.1} parent=5 // pred_fallthru
        _
      %p264 = scmp.le.s32.totalorder 1, %s17
      %p265 = scmp.lt.s32.totalorder %s17, 3
      %p266 = pnand %p264, %p265
      %p267 = pneg %p266
      // Predicated region
      $region49: #{tpu_custom_call.1} parent=5 // pred_check
        _
      $region50: #{tpu_custom_call.1} parent=5 // pred_check_branch
        %269 = sbr.rel (%p266) target = $region52
      $region51: #{tpu_custom_call.1} parent=5 // pred_region
        %s270 = ssub.s32 %s17, 1
        %p271 = scmp.lt.s32.totalorder %s22, 1
        %s272 = scalar_select %p271, %s22, 1
        %s273 = smul.addr %s272, 8
        %s274 = smul.addr %s273, 8
        %s275 = scalar_lea.vmem %s0, %s274
        %p276 = pneg %p43
        %p277 = pneg %p40
        %p278 = pneg %p64
        %p279 = pneg %p61
        %p280 = pneg %p85
        %p281 = pneg %p82
        %p282 = pneg %p106
        %p283 = pneg %p103
        %p284 = pneg %p127
        %p285 = pneg %p124
        %p286 = pneg %p148
        %p287 = pneg %p145
        %p288 = pneg %p169
        %p289 = pneg %p166
        %p290 = pneg %p190
        %p291 = pneg %p187
        %p292 = pneg %p216
        %p293 = pneg %p213
        %s294 = sand.u32 %s203, 1
        %s295 = scalar_lea.sflag [#allocation3], %s294
        %s296 = sand.u32 %s203, 1
        %s297 = smul.addr %s296, 64
        %s298 = scalar_lea.vmem [#allocation2], %s297
        %p299 = scmp.lt.s32.totalorder %s22, 1
        %s300 = scalar_select %p299, %s22, 1
        %s301 = smul.addr %s300, 8
        %s302 = smul.addr %s301, 8
        %s303 = scalar_lea.vmem %s0, %s302
        %v304 = vld [vmem:[%s303] sm:$0xff]
        %v305 = vld [vmem:[%s303 + $0x8] sm:$0xff]
        %v306 = vld [vmem:[%s303 + $0x10] sm:$0xff]
        %v307 = vld [vmem:[%s303 + $0x18] sm:$0xff]
        %v308 = vld [vmem:[%s303 + $0x20] sm:$0xff]
        %v309 = vld [vmem:[%s303 + $0x28] sm:$0xff]
        %v310 = vld [vmem:[%s303 + $0x30] sm:$0xff]
        %v311 = vld [vmem:[%s303 + $0x38] sm:$0xff]
        %v312 = vld [vmem:[%s1] sm:$0xff]
        %v313 = vld [vmem:[%s1 + $0x8] sm:$0xff]
        %v314 = vld [vmem:[%s1 + $0x10] sm:$0xff]
        %v315 = vld [vmem:[%s1 + $0x18] sm:$0xff]
        %v316 = vld [vmem:[%s2] sm:$0xff]
        %v317 = vld [vmem:[%s2 + $0x8] sm:$0xff]
        %v318 = vld [vmem:[%s2 + $0x10] sm:$0xff]
        %v319 = vld [vmem:[%s2 + $0x18] sm:$0xff]
        %321 = vset.pattern.permute.xlu0 0
        %322 = vperm.xlu0 %321, %v316
        %v323 = vpop.permute.xlu0 %322
        %326 = vset.pattern.permute.xlu0 0
        %327 = vperm.xlu0 %326, %v317
        %v328 = vpop.permute.xlu0 %327
        %331 = vset.pattern.permute.xlu0 0
        %332 = vperm.xlu0 %331, %v318
        %v333 = vpop.permute.xlu0 %332
        %336 = vset.pattern.permute.xlu0 0
        %337 = vperm.xlu0 %336, %v319
        %v338 = vpop.permute.xlu0 %337
        %vm340 = vcmask 261120
        %v342 = vsel %vm340, %v312, 0
        %v345 = vsel %vm340, %v313, 0
        %v348 = vsel %vm340, %v314, 0
        %v351 = vsel %vm340, %v315, 0
        %353 = vmatprep.subr.mxu0 %v305
        %354 = vmatpush1.msra.mxu0 %v304
        %355 = vmatprep.subr.mxu0 %v307
        %356 = vmatpush1.msra.mxu0 %v306
        %357 = vmatprep.subr.mxu0 %v309
        %358 = vmatpush1.msra.mxu0 %v308
        %359 = vmatprep.subr.mxu0 %v311
        %360 = vmatpush1.msra.mxu0 %v310
        %361 = vmatprep.subr.mxu0 0.0
        %362 = vmatpush1.msra.mxu0 0.0
        %363 = vmatprep.subr.mxu0 0.0
        %364 = vmatpush1.msra.mxu0 0.0
        %365 = vmatprep.subr.mxu0 0.0
        %366 = vmatpush1.msra.mxu0 0.0
        %367 = vmatprep.subr.mxu0 0.0
        %368 = vmatpush1.msra.mxu0 0.0
        %369 = vmatprep.subr.mxu0 0.0
        %370 = vmatpush1.msra.mxu0 0.0
        %371 = vmatprep.subr.mxu0 0.0
        %372 = vmatpush1.msra.mxu0 0.0
        %373 = vmatprep.subr.mxu0 0.0
        %374 = vmatpush1.msra.mxu0 0.0
        %375 = vmatprep.subr.mxu0 0.0
        %376 = vmatpush1.msra.mxu0 0.0
        %377 = vmatprep.subr.mxu0 0.0
        %378 = vmatpush1.msra.mxu0 0.0
        %379 = vmatprep.subr.mxu0 0.0
        %380 = vmatpush1.msra.mxu0 0.0
        %381 = vmatprep.subr.mxu0 0.0
        %382 = vmatpush1.msra.mxu0 0.0
        %383 = vmatprep.subr.mxu0 0.0
        %384 = vmatpush1.msra.mxu0 0.0
        %385 = vmatprep.subr.mxu0 0.0
        %386 = vmatpush1.msra.mxu0 0.0
        %387 = vmatprep.subr.mxu0 0.0
        %388 = vmatpush1.msra.mxu0 0.0
        %389 = vmatprep.subr.mxu0 0.0
        %390 = vmatpush1.msra.mxu0 0.0
        %391 = vmatprep.subr.mxu0 0.0
        %392 = vmatpush1.msra.mxu0 0.0
        %393 = vmatprep.subr.mxu0 0.0
        %394 = vmatpush1.msra.mxu0 0.0
        %395 = vmatprep.subr.mxu0 0.0
        %396 = vmatpush1.msra.mxu0 0.0
        %397 = vmatprep.subr.mxu0 0.0
        %398 = vmatpush1.msra.mxu0 0.0
        %399 = vmatprep.subr.mxu0 0.0
        %400 = vmatpush1.msra.mxu0 0.0
        %401 = vmatprep.subr.mxu0 0.0
        %402 = vmatpush1.msra.mxu0 0.0
        %403 = vmatprep.subr.mxu0 0.0
        %404 = vmatpush1.msra.mxu0 0.0
        %405 = vmatprep.subr.mxu0 0.0
        %406 = vmatpush1.msra.mxu0 0.0
        %407 = vmatprep.subr.mxu0 0.0
        %408 = vmatpush1.msra.mxu0 0.0
        %409 = vmatprep.subr.mxu0 0.0
        %410 = vmatpush1.msra.mxu0 0.0
        %411 = vmatprep.subr.mxu0 0.0
        %412 = vmatpush1.msra.mxu0 0.0
        %413 = vmatprep.subr.mxu0 0.0
        %414 = vmatpush1.msra.mxu0 0.0
        %415 = vmatprep.subr.mxu0 0.0
        %416 = vmatpush1.msra.mxu0 0.0
        %417 = vmatprep.mubr.f32.mxu0 0.0
        %418 = vmatmul.mubr.f32.gmra.mrb[0].mxu0 %v342
        %v419 = vpop.f32.mrb[0].mxu0
        %v420 = vadd.f32 %v323, %v419
        %v421 = vpop.f32.mrb[0].mxu0
        %v422 = vadd.f32 %v323, %v421
        %423 = vmatprep.mubr.f32.mxu0 0.0
        %424 = vmatmul.mubr.f32.gmra.mrb[0].mxu0 %v345
        %v425 = vpop.f32.mrb[0].mxu0
        %v426 = vadd.f32 %v328, %v425
        %v427 = vpop.f32.mrb[0].mxu0
        %v428 = vadd.f32 %v328, %v427
        %429 = vmatprep.mubr.f32.mxu0 0.0
        %430 = vmatmul.mubr.f32.gmra.mrb[0].mxu0 %v348
        %v431 = vpop.f32.mrb[0].mxu0
        %v432 = vadd.f32 %v333, %v431
        %v433 = vpop.f32.mrb[0].mxu0
        %v434 = vadd.f32 %v333, %v433
        %435 = vmatprep.mubr.f32.mxu0 0.0
        %436 = vmatmul.mubr.f32.gmra.mrb[0].mxu0 %v351
        %v437 = vpop.f32.mrb[0].mxu0
        %v438 = vadd.f32 %v338, %v437
        %v439 = vpop.f32.mrb[0].mxu0
        %v440 = vadd.f32 %v338, %v439
        %441 = vdwg.mxu0
        %v442 = vmax.f32 %v420, 0.0
        %v443 = vmax.f32 %v422, 0.0
        %v444 = vmax.f32 %v426, 0.0
        %v445 = vmax.f32 %v428, 0.0
        %v446 = vmax.f32 %v432, 0.0
        %v447 = vmax.f32 %v434, 0.0
        %v448 = vmax.f32 %v438, 0.0
        %v449 = vmax.f32 %v440, 0.0
        %v450 = vld [vmem:[%s3] sm:$0xff]
        %v451 = vld [vmem:[%s3 + $0x8] sm:$0xff]
        %v452 = vld [vmem:[%s3 + $0x10] sm:$0xff]
        %v453 = vld [vmem:[%s3 + $0x18] sm:$0xff]
        %v454 = vld [vmem:[%s3 + $0x20] sm:$0xff]
        %v455 = vld [vmem:[%s3 + $0x28] sm:$0xff]
        %v456 = vld [vmem:[%s3 + $0x30] sm:$0xff]
        %v457 = vld [vmem:[%s3 + $0x38] sm:$0xff]
        %v458 = vld [vmem:[%s3 + $0x40] sm:$0xff]
        %v459 = vld [vmem:[%s3 + $0x48] sm:$0xff]
        %v460 = vld [vmem:[%s3 + $0x50] sm:$0xff]
        %v461 = vld [vmem:[%s3 + $0x58] sm:$0xff]
        %v462 = vld [vmem:[%s3 + $0x60] sm:$0xff]
        %v463 = vld [vmem:[%s3 + $0x68] sm:$0xff]
        %v464 = vld [vmem:[%s3 + $0x70] sm:$0xff]
        %v465 = vld [vmem:[%s3 + $0x78] sm:$0xff]
        %v466 = vld [vmem:[%s3 + $0x80] sm:$0xff]
        %v467 = vld [vmem:[%s3 + $0x88] sm:$0xff]
        %v468 = vld [vmem:[%s3 + $0x90] sm:$0xff]
        %v469 = vld [vmem:[%s3 + $0x98] sm:$0xff]
        %v470 = vld [vmem:[%s3 + $0xa0] sm:$0xff]
        %v471 = vld [vmem:[%s3 + $0xa8] sm:$0xff]
        %v472 = vld [vmem:[%s3 + $0xb0] sm:$0xff]
        %v473 = vld [vmem:[%s3 + $0xb8] sm:$0xff]
        %v474 = vld [vmem:[%s3 + $0xc0] sm:$0xff]
        %v475 = vld [vmem:[%s3 + $0xc8] sm:$0xff]
        %v476 = vld [vmem:[%s3 + $0xd0] sm:$0xff]
        %v477 = vld [vmem:[%s3 + $0xd8] sm:$0xff]
        %v478 = vld [vmem:[%s3 + $0xe0] sm:$0xff]
        %v479 = vld [vmem:[%s3 + $0xe8] sm:$0xff]
        %v480 = vld [vmem:[%s3 + $0xf0] sm:$0xff]
        %v481 = vld [vmem:[%s3 + $0xf8] sm:$0xff]
        %v482 = vld [vmem:[%s3 + $0x100] sm:$0xff]
        %v483 = vld [vmem:[%s3 + $0x108] sm:$0xff]
        %v484 = vld [vmem:[%s3 + $0x110] sm:$0xff]
        %v485 = vld [vmem:[%s3 + $0x118] sm:$0xff]
        %v487 = vsel %vm340, %v450, 0
        %v490 = vsel %vm340, %v451, 0
        %v493 = vsel %vm340, %v452, 0
        %v496 = vsel %vm340, %v453, 0
        %v499 = vsel %vm340, %v454, 0
        %v502 = vsel %vm340, %v455, 0
        %v505 = vsel %vm340, %v456, 0
        %v508 = vsel %vm340, %v457, 0
        %v511 = vsel %vm340, %v458, 0
        %v514 = vsel %vm340, %v459, 0
        %v517 = vsel %vm340, %v460, 0
        %v520 = vsel %vm340, %v461, 0
        %v523 = vsel %vm340, %v462, 0
        %v526 = vsel %vm340, %v463, 0
        %v529 = vsel %vm340, %v464, 0
        %v532 = vsel %vm340, %v465, 0
        %v535 = vsel %vm340, %v466, 0
        %v538 = vsel %vm340, %v467, 0
        %v541 = vsel %vm340, %v468, 0
        %v544 = vsel %vm340, %v469, 0
        %v547 = vsel %vm340, %v470, 0
        %v550 = vsel %vm340, %v471, 0
        %v553 = vsel %vm340, %v472, 0
        %v556 = vsel %vm340, %v473, 0
        %v559 = vsel %vm340, %v474, 0
        %v562 = vsel %vm340, %v475, 0
        %v565 = vsel %vm340, %v476, 0
        %v568 = vsel %vm340, %v477, 0
        %v571 = vsel %vm340, %v478, 0
        %v574 = vsel %vm340, %v479, 0
        %v577 = vsel %vm340, %v480, 0
        %v580 = vsel %vm340, %v481, 0
        %v583 = vsel %vm340, %v482, 0
        %v586 = vsel %vm340, %v483, 0
        %v589 = vsel %vm340, %v484, 0
        %v592 = vsel %vm340, %v485, 0
        %594 = vmatprep.subr.mxu0 %v443
        %595 = vmatpush1.msra.mxu0 %v442
        %596 = vmatprep.subr.mxu0 %v445
        %597 = vmatpush1.msra.mxu0 %v444
        %598 = vmatprep.subr.mxu0 %v447
        %599 = vmatpush1.msra.mxu0 %v446
        %600 = vmatprep.subr.mxu0 %v449
        %601 = vmatpush1.msra.mxu0 %v448
        %602 = vmatprep.subr.mxu0 0.0
        %603 = vmatpush1.msra.mxu0 0.0
        %604 = vmatprep.subr.mxu0 0.0
        %605 = vmatpush1.msra.mxu0 0.0
        %606 = vmatprep.subr.mxu0 0.0
        %607 = vmatpush1.msra.mxu0 0.0
        %608 = vmatprep.subr.mxu0 0.0
        %609 = vmatpush1.msra.mxu0 0.0
        %610 = vmatprep.subr.mxu0 0.0
        %611 = vmatpush1.msra.mxu0 0.0
        %612 = vmatprep.subr.mxu0 0.0
        %613 = vmatpush1.msra.mxu0 0.0
        %614 = vmatprep.subr.mxu0 0.0
        %615 = vmatpush1.msra.mxu0 0.0
        %616 = vmatprep.subr.mxu0 0.0
        %617 = vmatpush1.msra.mxu0 0.0
        %618 = vmatprep.subr.mxu0 0.0
        %619 = vmatpush1.msra.mxu0 0.0
        %620 = vmatprep.subr.mxu0 0.0
        %621 = vmatpush1.msra.mxu0 0.0
        %622 = vmatprep.subr.mxu0 0.0
        %623 = vmatpush1.msra.mxu0 0.0
        %624 = vmatprep.subr.mxu0 0.0
        %625 = vmatpush1.msra.mxu0 0.0
        %626 = vmatprep.subr.mxu0 0.0
        %627 = vmatpush1.msra.mxu0 0.0
        %628 = vmatprep.subr.mxu0 0.0
        %629 = vmatpush1.msra.mxu0 0.0
        %630 = vmatprep.subr.mxu0 0.0
        %631 = vmatpush1.msra.mxu0 0.0
        %632 = vmatprep.subr.mxu0 0.0
        %633 = vmatpush1.msra.mxu0 0.0
        %634 = vmatprep.subr.mxu0 0.0
        %635 = vmatpush1.msra.mxu0 0.0
        %636 = vmatprep.subr.mxu0 0.0
        %637 = vmatpush1.msra.mxu0 0.0
        %638 = vmatprep.subr.mxu0 0.0
        %639 = vmatpush1.msra.mxu0 0.0
        %640 = vmatprep.subr.mxu0 0.0
        %641 = vmatpush1.msra.mxu0 0.0
        %642 = vmatprep.subr.mxu0 0.0
        %643 = vmatpush1.msra.mxu0 0.0
        %644 = vmatprep.subr.mxu0 0.0
        %645 = vmatpush1.msra.mxu0 0.0
        %646 = vmatprep.subr.mxu0 0.0
        %647 = vmatpush1.msra.mxu0 0.0
        %648 = vmatprep.subr.mxu0 0.0
        %649 = vmatpush1.msra.mxu0 0.0
        %650 = vmatprep.subr.mxu0 0.0
        %651 = vmatpush1.msra.mxu0 0.0
        %652 = vmatprep.subr.mxu0 0.0
        %653 = vmatpush1.msra.mxu0 0.0
        %654 = vmatprep.subr.mxu0 0.0
        %655 = vmatpush1.msra.mxu0 0.0
        %656 = vmatprep.subr.mxu0 0.0
        %657 = vmatpush1.msra.mxu0 0.0
        %658 = vmatprep.mubr.f32.mxu0 0.0
        %659 = vmatmul.mubr.f32.gmra.mrb[0].mxu0 %v487
        %v660 = vpop.f32.mrb[0].mxu0
        %v661 = vadd.f32 0.0, %v660
        %v662 = vpop.f32.mrb[0].mxu0
        %v663 = vadd.f32 0.0, %v662
        %664 = vmatprep.mubr.f32.mxu0 0.0
        %665 = vmatmul.mubr.f32.gmra.mrb[0].mxu0 %v490
        %v666 = vpop.f32.mrb[0].mxu0
        %v667 = vadd.f32 0.0, %v666
        %v668 = vpop.f32.mrb[0].mxu0
        %v669 = vadd.f32 0.0, %v668
        %670 = vmatprep.mubr.f32.mxu0 0.0
        %671 = vmatmul.mubr.f32.gmra.mrb[0].mxu0 %v493
        %v672 = vpop.f32.mrb[0].mxu0
        %v673 = vadd.f32 0.0, %v672
        %v674 = vpop.f32.mrb[0].mxu0
        %v675 = vadd.f32 0.0, %v674
        %676 = vmatprep.mubr.f32.mxu0 0.0
        %677 = vmatmul.mubr.f32.gmra.mrb[0].mxu0 %v496
        %v678 = vpop.f32.mrb[0].mxu0
        %v679 = vadd.f32 0.0, %v678
        %v680 = vpop.f32.mrb[0].mxu0
        %v681 = vadd.f32 0.0, %v680
        %682 = vmatprep.mubr.f32.mxu0 0.0
        %683 = vmatmul.mubr.f32.gmra.mrb[0].mxu0 %v499
        %v684 = vpop.f32.mrb[0].mxu0
        %v685 = vadd.f32 0.0, %v684
        %v686 = vpop.f32.mrb[0].mxu0
        %v687 = vadd.f32 0.0, %v686
        %688 = vmatprep.mubr.f32.mxu0 0.0
        %689 = vmatmul.mubr.f32.gmra.mrb[0].mxu0 %v502
        %v690 = vpop.f32.mrb[0].mxu0
        %v691 = vadd.f32 0.0, %v690
        %v692 = vpop.f32.mrb[0].mxu0
        %v693 = vadd.f32 0.0, %v692
        %694 = vmatprep.mubr.f32.mxu0 0.0
        %695 = vmatmul.mubr.f32.gmra.mrb[0].mxu0 %v505
        %v696 = vpop.f32.mrb[0].mxu0
        %v697 = vadd.f32 0.0, %v696
        %v698 = vpop.f32.mrb[0].mxu0
        %v699 = vadd.f32 0.0, %v698
        %700 = vmatprep.mubr.f32.mxu0 0.0
        %701 = vmatmul.mubr.f32.gmra.mrb[0].mxu0 %v508
        %v702 = vpop.f32.mrb[0].mxu0
        %v703 = vadd.f32 0.0, %v702
        %v704 = vpop.f32.mrb[0].mxu0
        %v705 = vadd.f32 0.0, %v704
        %706 = vmatprep.mubr.f32.mxu0 0.0
        %707 = vmatmul.mubr.f32.gmra.mrb[0].mxu0 %v511
        %v708 = vpop.f32.mrb[0].mxu0
        %v709 = vadd.f32 0.0, %v708
        %v710 = vpop.f32.mrb[0].mxu0
        %v711 = vadd.f32 0.0, %v710
        %712 = vmatprep.mubr.f32.mxu0 0.0
        %713 = vmatmul.mubr.f32.gmra.mrb[0].mxu0 %v514
        %v714 = vpop.f32.mrb[0].mxu0
        %v715 = vadd.f32 0.0, %v714
        %v716 = vpop.f32.mrb[0].mxu0
        %v717 = vadd.f32 0.0, %v716
        %718 = vmatprep.mubr.f32.mxu0 0.0
        %719 = vmatmul.mubr.f32.gmra.mrb[0].mxu0 %v517
        %v720 = vpop.f32.mrb[0].mxu0
        %v721 = vadd.f32 0.0, %v720
        %v722 = vpop.f32.mrb[0].mxu0
        %v723 = vadd.f32 0.0, %v722
        %724 = vmatprep.mubr.f32.mxu0 0.0
        %725 = vmatmul.mubr.f32.gmra.mrb[0].mxu0 %v520
        %v726 = vpop.f32.mrb[0].mxu0
        %v727 = vadd.f32 0.0, %v726
        %v728 = vpop.f32.mrb[0].mxu0
        %v729 = vadd.f32 0.0, %v728
        %730 = vmatprep.mubr.f32.mxu0 0.0
        %731 = vmatmul.mubr.f32.gmra.mrb[0].mxu0 %v523
        %v732 = vpop.f32.mrb[0].mxu0
        %v733 = vadd.f32 0.0, %v732
        %v734 = vpop.f32.mrb[0].mxu0
        %v735 = vadd.f32 0.0, %v734
        %736 = vmatprep.mubr.f32.mxu0 0.0
        %737 = vmatmul.mubr.f32.gmra.mrb[0].mxu0 %v526
        %v738 = vpop.f32.mrb[0].mxu0
        %v739 = vadd.f32 0.0, %v738
        %v740 = vpop.f32.mrb[0].mxu0
        %v741 = vadd.f32 0.0, %v740
        %742 = vmatprep.mubr.f32.mxu0 0.0
        %743 = vmatmul.mubr.f32.gmra.mrb[0].mxu0 %v529
        %v744 = vpop.f32.mrb[0].mxu0
        %v745 = vadd.f32 0.0, %v744
        %v746 = vpop.f32.mrb[0].mxu0
        %v747 = vadd.f32 0.0, %v746
        %748 = vmatprep.mubr.f32.mxu0 0.0
        %749 = vmatmul.mubr.f32.gmra.mrb[0].mxu0 %v532
        %v750 = vpop.f32.mrb[0].mxu0
        %v751 = vadd.f32 0.0, %v750
        %v752 = vpop.f32.mrb[0].mxu0
        %v753 = vadd.f32 0.0, %v752
        %754 = vmatprep.mubr.f32.mxu0 0.0
        %755 = vmatmul.mubr.f32.gmra.mrb[0].mxu0 %v535
        %v756 = vpop.f32.mrb[0].mxu0
        %v757 = vadd.f32 0.0, %v756
        %v758 = vpop.f32.mrb[0].mxu0
        %v759 = vadd.f32 0.0, %v758
        %760 = vmatprep.mubr.f32.mxu0 0.0
        %761 = vmatmul.mubr.f32.gmra.mrb[0].mxu0 %v538
        %v762 = vpop.f32.mrb[0].mxu0
        %v763 = vadd.f32 0.0, %v762
        %v764 = vpop.f32.mrb[0].mxu0
        %v765 = vadd.f32 0.0, %v764
        %766 = vmatprep.mubr.f32.mxu0 0.0
        %767 = vmatmul.mubr.f32.gmra.mrb[0].mxu0 %v541
        %v768 = vpop.f32.mrb[0].mxu0
        %v769 = vadd.f32 0.0, %v768
        %v770 = vpop.f32.mrb[0].mxu0
        %v771 = vadd.f32 0.0, %v770
        %772 = vmatprep.mubr.f32.mxu0 0.0
        %773 = vmatmul.mubr.f32.gmra.mrb[0].mxu0 %v544
        %v774 = vpop.f32.mrb[0].mxu0
        %v775 = vadd.f32 0.0, %v774
        %v776 = vpop.f32.mrb[0].mxu0
        %v777 = vadd.f32 0.0, %v776
        %778 = vmatprep.mubr.f32.mxu0 0.0
        %779 = vmatmul.mubr.f32.gmra.mrb[0].mxu0 %v547
        %v780 = vpop.f32.mrb[0].mxu0
        %v781 = vadd.f32 0.0, %v780
        %v782 = vpop.f32.mrb[0].mxu0
        %v783 = vadd.f32 0.0, %v782
        %784 = vmatprep.mubr.f32.mxu0 0.0
        %785 = vmatmul.mubr.f32.gmra.mrb[0].mxu0 %v550
        %v786 = vpop.f32.mrb[0].mxu0
        %v787 = vadd.f32 0.0, %v786
        %v788 = vpop.f32.mrb[0].mxu0
        %v789 = vadd.f32 0.0, %v788
        %790 = vmatprep.mubr.f32.mxu0 0.0
        %791 = vmatmul.mubr.f32.gmra.mrb[0].mxu0 %v553
        %v792 = vpop.f32.mrb[0].mxu0
        %v793 = vadd.f32 0.0, %v792
        %v794 = vpop.f32.mrb[0].mxu0
        %v795 = vadd.f32 0.0, %v794
        %796 = vmatprep.mubr.f32.mxu0 0.0
        %797 = vmatmul.mubr.f32.gmra.mrb[0].mxu0 %v556
        %v798 = vpop.f32.mrb[0].mxu0
        %v799 = vadd.f32 0.0, %v798
        %v800 = vpop.f32.mrb[0].mxu0
        %v801 = vadd.f32 0.0, %v800
        %802 = vmatprep.mubr.f32.mxu0 0.0
        %803 = vmatmul.mubr.f32.gmra.mrb[0].mxu0 %v559
        %v804 = vpop.f32.mrb[0].mxu0
        %v805 = vadd.f32 0.0, %v804
        %v806 = vpop.f32.mrb[0].mxu0
        %v807 = vadd.f32 0.0, %v806
        %808 = vmatprep.mubr.f32.mxu0 0.0
        %809 = vmatmul.mubr.f32.gmra.mrb[0].mxu0 %v562
        %v810 = vpop.f32.mrb[0].mxu0
        %v811 = vadd.f32 0.0, %v810
        %v812 = vpop.f32.mrb[0].mxu0
        %v813 = vadd.f32 0.0, %v812
        %814 = vmatprep.mubr.f32.mxu0 0.0
        %815 = vmatmul.mubr.f32.gmra.mrb[0].mxu0 %v565
        %v816 = vpop.f32.mrb[0].mxu0
        %v817 = vadd.f32 0.0, %v816
        %v818 = vpop.f32.mrb[0].mxu0
        %v819 = vadd.f32 0.0, %v818
        %820 = vmatprep.mubr.f32.mxu0 0.0
        %821 = vmatmul.mubr.f32.gmra.mrb[0].mxu0 %v568
        %v822 = vpop.f32.mrb[0].mxu0
        %v823 = vadd.f32 0.0, %v822
        %v824 = vpop.f32.mrb[0].mxu0
        %v825 = vadd.f32 0.0, %v824
        %826 = vmatprep.mubr.f32.mxu0 0.0
        %827 = vmatmul.mubr.f32.gmra.mrb[0].mxu0 %v571
        %v828 = vpop.f32.mrb[0].mxu0
        %v829 = vadd.f32 0.0, %v828
        %v830 = vpop.f32.mrb[0].mxu0
        %v831 = vadd.f32 0.0, %v830
        %832 = vmatprep.mubr.f32.mxu0 0.0
        %833 = vmatmul.mubr.f32.gmra.mrb[0].mxu0 %v574
        %v834 = vpop.f32.mrb[0].mxu0
        %v835 = vadd.f32 0.0, %v834
        %v836 = vpop.f32.mrb[0].mxu0
        %v837 = vadd.f32 0.0, %v836
        %838 = vmatprep.mubr.f32.mxu0 0.0
        %839 = vmatmul.mubr.f32.gmra.mrb[0].mxu0 %v577
        %v840 = vpop.f32.mrb[0].mxu0
        %v841 = vadd.f32 0.0, %v840
        %v842 = vpop.f32.mrb[0].mxu0
        %v843 = vadd.f32 0.0, %v842
        %844 = vmatprep.mubr.f32.mxu0 0.0
        %845 = vmatmul.mubr.f32.gmra.mrb[0].mxu0 %v580
        %v846 = vpop.f32.mrb[0].mxu0
        %v847 = vadd.f32 0.0, %v846
        %v848 = vpop.f32.mrb[0].mxu0
        %v849 = vadd.f32 0.0, %v848
        %850 = vmatprep.mubr.f32.mxu0 0.0
        %851 = vmatmul.mubr.f32.gmra.mrb[0].mxu0 %v583
        %v852 = vpop.f32.mrb[0].mxu0
        %v853 = vadd.f32 0.0, %v852
        %v854 = vpop.f32.mrb[0].mxu0
        %v855 = vadd.f32 0.0, %v854
        %856 = vmatprep.mubr.f32.mxu0 0.0
        %857 = vmatmul.mubr.f32.gmra.mrb[0].mxu0 %v586
        %v858 = vpop.f32.mrb[0].mxu0
        %v859 = vadd.f32 0.0, %v858
        %v860 = vpop.f32.mrb[0].mxu0
        %v861 = vadd.f32 0.0, %v860
        %862 = vmatprep.mubr.f32.mxu0 0.0
        %863 = vmatmul.mubr.f32.gmra.mrb[0].mxu0 %v589
        %v864 = vpop.f32.mrb[0].mxu0
        %v865 = vadd.f32 0.0, %v864
        %v866 = vpop.f32.mrb[0].mxu0
        %v867 = vadd.f32 0.0, %v866
        %868 = vmatprep.mubr.f32.mxu0 0.0
        %869 = vmatmul.mubr.f32.gmra.mrb[0].mxu0 %v592
        %v870 = vpop.f32.mrb[0].mxu0
        %v871 = vadd.f32 0.0, %v870
        %v872 = vpop.f32.mrb[0].mxu0
        %v873 = vadd.f32 0.0, %v872
        %874 = vdwg.mxu0
        %875 = vrot.lane.b32.xlu0 %v661, 17
        %v876 = vpop.permute.xlu0 %875
        %877 = vrot.lane.b32.xlu0 %v667, 17
        %v878 = vpop.permute.xlu0 %877
        %879 = vrot.lane.b32.xlu0 %v673, 17
        %v880 = vpop.permute.xlu0 %879
        %881 = vrot.lane.b32.xlu0 %v679, 17
        %v882 = vpop.permute.xlu0 %881
        %883 = vrot.lane.b32.xlu0 %v663, 17
        %v884 = vpop.permute.xlu0 %883
        %885 = vrot.lane.b32.xlu0 %v669, 17
        %v886 = vpop.permute.xlu0 %885
        %887 = vrot.lane.b32.xlu0 %v675, 17
        %v888 = vpop.permute.xlu0 %887
        %889 = vrot.lane.b32.xlu0 %v681, 17
        %v890 = vpop.permute.xlu0 %889
        %v891 = vlaneseq
        %v892 = vand.u32 %v891, 127
        %vm893 = vcmp.lt.s32.totalorder %v892, 17
        %v894 = vsel %vm893, %v876, %v884
        %v895 = vsel %vm893, %v878, %v886
        %v896 = vsel %vm893, %v880, %v888
        %v897 = vsel %vm893, %v882, %v890
        %v898 = vsel %vm893, %v884, %v876
        %v899 = vsel %vm893, %v886, %v878
        %v900 = vsel %vm893, %v888, %v880
        %v901 = vsel %vm893, %v890, %v882
        %v902 = vld [vmem:[%s4] sm:$0x3]
        %v904 = vlaneseq
        %v905 = vshrl.u32 %v904, 7
        %v906 = vsub.s32 0, %v905
        %v907 = vrot.slane %v902, %v906
        %v908 = vlaneseq
        %v909 = vshrl.u32 %v908, 7
        %v910 = vsub.s32 1, %v909
        %v911 = vrot.slane %v902, %v910
        %v914 = vmul.f32 %v898, %v907
        %v915 = vmul.f32 %v894, %v911
        %v916 = vmul.f32 %v899, %v907
        %v917 = vmul.f32 %v895, %v911
        %v918 = vmul.f32 %v900, %v907
        %v919 = vmul.f32 %v896, %v911
        %v920 = vmul.f32 %v901, %v907
        %v921 = vmul.f32 %v897, %v911
        %v922 = vadd.f32 %v914, 0.0
        %v923 = vadd.f32 %v915, 0.0
        %v924 = vadd.f32 %v916, 0.0
        %v925 = vadd.f32 %v917, 0.0
        %v926 = vadd.f32 %v918, 0.0
        %v927 = vadd.f32 %v919, 0.0
        %v928 = vadd.f32 %v920, 0.0
        %v929 = vadd.f32 %v921, 0.0
        %930 = vrot.lane.b32.xlu0 %v685, 16
        %v931 = vpop.permute.xlu0 %930
        %932 = vrot.lane.b32.xlu0 %v691, 16
        %v933 = vpop.permute.xlu0 %932
        %934 = vrot.lane.b32.xlu0 %v697, 16
        %v935 = vpop.permute.xlu0 %934
        %936 = vrot.lane.b32.xlu0 %v703, 16
        %v937 = vpop.permute.xlu0 %936
        %938 = vrot.lane.b32.xlu0 %v687, 16
        %v939 = vpop.permute.xlu0 %938
        %940 = vrot.lane.b32.xlu0 %v693, 16
        %v941 = vpop.permute.xlu0 %940
        %942 = vrot.lane.b32.xlu0 %v699, 16
        %v943 = vpop.permute.xlu0 %942
        %944 = vrot.lane.b32.xlu0 %v705, 16
        %v945 = vpop.permute.xlu0 %944
        %vm946 = vcmp.lt.s32.totalorder %v892, 16
        %v947 = vsel %vm946, %v931, %v939
        %v948 = vsel %vm946, %v933, %v941
        %v949 = vsel %vm946, %v935, %v943
        %v950 = vsel %vm946, %v937, %v945
        %v951 = vsel %vm946, %v939, %v931
        %v952 = vsel %vm946, %v941, %v933
        %v953 = vsel %vm946, %v943, %v935
        %v954 = vsel %vm946, %v945, %v937
        %s955 = scalar_lea.vmem %s4, 2
        %v956 = vld [vmem:[%s955] sm:$0x3]
        %v958 = vlaneseq
        %v959 = vshrl.u32 %v958, 7
        %v960 = vsub.s32 0, %v959
        %v961 = vrot.slane %v956, %v960
        %v962 = vlaneseq
        %v963 = vshrl.u32 %v962, 7
        %v964 = vsub.s32 1, %v963
        %v965 = vrot.slane %v956, %v964
        %v968 = vmul.f32 %v951, %v961
        %v969 = vmul.f32 %v947, %v965
        %v970 = vmul.f32 %v952, %v961
        %v971 = vmul.f32 %v948, %v965
        %v972 = vmul.f32 %v953, %v961
        %v973 = vmul.f32 %v949, %v965
        %v974 = vmul.f32 %v954, %v961
        %v975 = vmul.f32 %v950, %v965
        %v976 = vadd.f32 %v922, %v968
        %v977 = vadd.f32 %v923, %v969
        %v978 = vadd.f32 %v924, %v970
        %v979 = vadd.f32 %v925, %v971
        %v980 = vadd.f32 %v926, %v972
        %v981 = vadd.f32 %v927, %v973
        %v982 = vadd.f32 %v928, %v974
        %v983 = vadd.f32 %v929, %v975
        %984 = vrot.lane.b32.xlu0 %v709, 15
        %v985 = vpop.permute.xlu0 %984
        %986 = vrot.lane.b32.xlu0 %v715, 15
        %v987 = vpop.permute.xlu0 %986
        %988 = vrot.lane.b32.xlu0 %v721, 15
        %v989 = vpop.permute.xlu0 %988
        %990 = vrot.lane.b32.xlu0 %v727, 15
        %v991 = vpop.permute.xlu0 %990
        %992 = vrot.lane.b32.xlu0 %v711, 15
        %v993 = vpop.permute.xlu0 %992
        %994 = vrot.lane.b32.xlu0 %v717, 15
        %v995 = vpop.permute.xlu0 %994
        %996 = vrot.lane.b32.xlu0 %v723, 15
        %v997 = vpop.permute.xlu0 %996
        %998 = vrot.lane.b32.xlu0 %v729, 15
        %v999 = vpop.permute.xlu0 %998
        %vm1000 = vcmp.lt.s32.totalorder %v892, 15
        %v1001 = vsel %vm1000, %v985, %v993
        %v1002 = vsel %vm1000, %v987, %v995
        %v1003 = vsel %vm1000, %v989, %v997
        %v1004 = vsel %vm1000, %v991, %v999
        %v1005 = vsel %vm1000, %v993, %v985
        %v1006 = vsel %vm1000, %v995, %v987
        %v1007 = vsel %vm1000, %v997, %v989
        %v1008 = vsel %vm1000, %v999, %v991
        %s1009 = scalar_lea.vmem %s4, 4
        %v1010 = vld [vmem:[%s1009] sm:$0x3]
        %v1012 = vlaneseq
        %v1013 = vshrl.u32 %v1012, 7
        %v1014 = vsub.s32 0, %v1013
        %v1015 = vrot.slane %v1010, %v1014
        %v1016 = vlaneseq
        %v1017 = vshrl.u32 %v1016, 7
        %v1018 = vsub.s32 1, %v1017
        %v1019 = vrot.slane %v1010, %v1018
        %v1022 = vmul.f32 %v1005, %v1015
        %v1023 = vmul.f32 %v1001, %v1019
        %v1024 = vmul.f32 %v1006, %v1015
        %v1025 = vmul.f32 %v1002, %v1019
        %v1026 = vmul.f32 %v1007, %v1015
        %v1027 = vmul.f32 %v1003, %v1019
        %v1028 = vmul.f32 %v1008, %v1015
        %v1029 = vmul.f32 %v1004, %v1019
        %v1030 = vadd.f32 %v976, %v1022
        %v1031 = vadd.f32 %v977, %v1023
        %v1032 = vadd.f32 %v978, %v1024
        %v1033 = vadd.f32 %v979, %v1025
        %v1034 = vadd.f32 %v980, %v1026
        %v1035 = vadd.f32 %v981, %v1027
        %v1036 = vadd.f32 %v982, %v1028
        %v1037 = vadd.f32 %v983, %v1029
        %1038 = vrot.lane.b32.xlu0 %v733, 1
        %v1039 = vpop.permute.xlu0 %1038
        %1040 = vrot.lane.b32.xlu0 %v739, 1
        %v1041 = vpop.permute.xlu0 %1040
        %1042 = vrot.lane.b32.xlu0 %v745, 1
        %v1043 = vpop.permute.xlu0 %1042
        %1044 = vrot.lane.b32.xlu0 %v751, 1
        %v1045 = vpop.permute.xlu0 %1044
        %1046 = vrot.lane.b32.xlu0 %v735, 1
        %v1047 = vpop.permute.xlu0 %1046
        %1048 = vrot.lane.b32.xlu0 %v741, 1
        %v1049 = vpop.permute.xlu0 %1048
        %1050 = vrot.lane.b32.xlu0 %v747, 1
        %v1051 = vpop.permute.xlu0 %1050
        %1052 = vrot.lane.b32.xlu0 %v753, 1
        %v1053 = vpop.permute.xlu0 %1052
        %vm1054 = vcmp.lt.s32.totalorder %v892, 1
        %v1055 = vsel %vm1054, %v1039, %v1047
        %v1056 = vsel %vm1054, %v1041, %v1049
        %v1057 = vsel %vm1054, %v1043, %v1051
        %v1058 = vsel %vm1054, %v1045, %v1053
        %v1059 = vsel %vm1054, %v1047, %v1039
        %v1060 = vsel %vm1054, %v1049, %v1041
        %v1061 = vsel %vm1054, %v1051, %v1043
        %v1062 = vsel %vm1054, %v1053, %v1045
        %s1063 = scalar_lea.vmem %s4, 6
        %v1064 = vld [vmem:[%s1063] sm:$0x3]
        %v1066 = vlaneseq
        %v1067 = vshrl.u32 %v1066, 7
        %v1068 = vsub.s32 0, %v1067
        %v1069 = vrot.slane %v1064, %v1068
        %v1070 = vlaneseq
        %v1071 = vshrl.u32 %v1070, 7
        %v1072 = vsub.s32 1, %v1071
        %v1073 = vrot.slane %v1064, %v1072
        %v1076 = vmul.f32 %v1059, %v1069
        %v1077 = vmul.f32 %v1055, %v1073
        %v1078 = vmul.f32 %v1060, %v1069
        %v1079 = vmul.f32 %v1056, %v1073
        %v1080 = vmul.f32 %v1061, %v1069
        %v1081 = vmul.f32 %v1057, %v1073
        %v1082 = vmul.f32 %v1062, %v1069
        %v1083 = vmul.f32 %v1058, %v1073
        %v1084 = vadd.f32 %v1030, %v1076
        %v1085 = vadd.f32 %v1031, %v1077
        %v1086 = vadd.f32 %v1032, %v1078
        %v1087 = vadd.f32 %v1033, %v1079
        %v1088 = vadd.f32 %v1034, %v1080
        %v1089 = vadd.f32 %v1035, %v1081
        %v1090 = vadd.f32 %v1036, %v1082
        %v1091 = vadd.f32 %v1037, %v1083
        %s1092 = scalar_lea.vmem %s4, 8
        %v1093 = vld [vmem:[%s1092] sm:$0x3]
        %v1095 = vlaneseq
        %v1096 = vshrl.u32 %v1095, 7
        %v1097 = vsub.s32 0, %v1096
        %v1098 = vrot.slane %v1093, %v1097
        %v1099 = vlaneseq
        %v1100 = vshrl.u32 %v1099, 7
        %v1101 = vsub.s32 1, %v1100
        %v1102 = vrot.slane %v1093, %v1101
        %v1105 = vmul.f32 %v757, %v1098
        %v1106 = vmul.f32 %v759, %v1102
        %v1107 = vmul.f32 %v763, %v1098
        %v1108 = vmul.f32 %v765, %v1102
        %v1109 = vmul.f32 %v769, %v1098
        %v1110 = vmul.f32 %v771, %v1102
        %v1111 = vmul.f32 %v775, %v1098
        %v1112 = vmul.f32 %v777, %v1102
        %v1113 = vadd.f32 %v1084, %v1105
        %v1114 = vadd.f32 %v1085, %v1106
        %v1115 = vadd.f32 %v1086, %v1107
        %v1116 = vadd.f32 %v1087, %v1108
        %v1117 = vadd.f32 %v1088, %v1109
        %v1118 = vadd.f32 %v1089, %v1110
        %v1119 = vadd.f32 %v1090, %v1111
        %v1120 = vadd.f32 %v1091, %v1112
        %1121 = vrot.lane.b32.xlu0 %v781, 127
        %v1122 = vpop.permute.xlu0 %1121
        %1123 = vrot.lane.b32.xlu0 %v787, 127
        %v1124 = vpop.permute.xlu0 %1123
        %1125 = vrot.lane.b32.xlu0 %v793, 127
        %v1126 = vpop.permute.xlu0 %1125
        %1127 = vrot.lane.b32.xlu0 %v799, 127
        %v1128 = vpop.permute.xlu0 %1127
        %1129 = vrot.lane.b32.xlu0 %v783, 127
        %v1130 = vpop.permute.xlu0 %1129
        %1131 = vrot.lane.b32.xlu0 %v789, 127
        %v1132 = vpop.permute.xlu0 %1131
        %1133 = vrot.lane.b32.xlu0 %v795, 127
        %v1134 = vpop.permute.xlu0 %1133
        %1135 = vrot.lane.b32.xlu0 %v801, 127
        %v1136 = vpop.permute.xlu0 %1135
        %vm1137 = vcmp.lt.s32.totalorder %v892, 127
        %v1138 = vsel %vm1137, %v1122, %v1130
        %v1139 = vsel %vm1137, %v1124, %v1132
        %v1140 = vsel %vm1137, %v1126, %v1134
        %v1141 = vsel %vm1137, %v1128, %v1136
        %v1142 = vsel %vm1137, %v1130, %v1122
        %v1143 = vsel %vm1137, %v1132, %v1124
        %v1144 = vsel %vm1137, %v1134, %v1126
        %v1145 = vsel %vm1137, %v1136, %v1128
        %s1146 = scalar_lea.vmem %s4, 10
        %v1147 = vld [vmem:[%s1146] sm:$0x3]
        %v1149 = vlaneseq
        %v1150 = vshrl.u32 %v1149, 7
        %v1151 = vsub.s32 0, %v1150
        %v1152 = vrot.slane %v1147, %v1151
        %v1153 = vlaneseq
        %v1154 = vshrl.u32 %v1153, 7
        %v1155 = vsub.s32 1, %v1154
        %v1156 = vrot.slane %v1147, %v1155
        %v1159 = vmul.f32 %v1138, %v1152
        %v1160 = vmul.f32 %v1142, %v1156
        %v1161 = vmul.f32 %v1139, %v1152
        %v1162 = vmul.f32 %v1143, %v1156
        %v1163 = vmul.f32 %v1140, %v1152
        %v1164 = vmul.f32 %v1144, %v1156
        %v1165 = vmul.f32 %v1141, %v1152
        %v1166 = vmul.f32 %v1145, %v1156
        %v1167 = vadd.f32 %v1113, %v1159
        %v1168 = vadd.f32 %v1114, %v1160
        %v1169 = vadd.f32 %v1115, %v1161
        %v1170 = vadd.f32 %v1116, %v1162
        %v1171 = vadd.f32 %v1117, %v1163
        %v1172 = vadd.f32 %v1118, %v1164
        %v1173 = vadd.f32 %v1119, %v1165
        %v1174 = vadd.f32 %v1120, %v1166
        %1175 = vrot.lane.b32.xlu0 %v805, 113
        %v1176 = vpop.permute.xlu0 %1175
        %1177 = vrot.lane.b32.xlu0 %v811, 113
        %v1178 = vpop.permute.xlu0 %1177
        %1179 = vrot.lane.b32.xlu0 %v817, 113
        %v1180 = vpop.permute.xlu0 %1179
        %1181 = vrot.lane.b32.xlu0 %v823, 113
        %v1182 = vpop.permute.xlu0 %1181
        %1183 = vrot.lane.b32.xlu0 %v807, 113
        %v1184 = vpop.permute.xlu0 %1183
        %1185 = vrot.lane.b32.xlu0 %v813, 113
        %v1186 = vpop.permute.xlu0 %1185
        %1187 = vrot.lane.b32.xlu0 %v819, 113
        %v1188 = vpop.permute.xlu0 %1187
        %1189 = vrot.lane.b32.xlu0 %v825, 113
        %v1190 = vpop.permute.xlu0 %1189
        %vm1191 = vcmp.lt.s32.totalorder %v892, 113
        %v1192 = vsel %vm1191, %v1176, %v1184
        %v1193 = vsel %vm1191, %v1178, %v1186
        %v1194 = vsel %vm1191, %v1180, %v1188
        %v1195 = vsel %vm1191, %v1182, %v1190
        %v1196 = vsel %vm1191, %v1184, %v1176
        %v1197 = vsel %vm1191, %v1186, %v1178
        %v1198 = vsel %vm1191, %v1188, %v1180
        %v1199 = vsel %vm1191, %v1190, %v1182
        %s1200 = scalar_lea.vmem %s4, 12
        %v1201 = vld [vmem:[%s1200] sm:$0x3]
        %v1203 = vlaneseq
        %v1204 = vshrl.u32 %v1203, 7
        %v1205 = vsub.s32 0, %v1204
        %v1206 = vrot.slane %v1201, %v1205
        %v1207 = vlaneseq
        %v1208 = vshrl.u32 %v1207, 7
        %v1209 = vsub.s32 1, %v1208
        %v1210 = vrot.slane %v1201, %v1209
        %v1213 = vmul.f32 %v1192, %v1206
        %v1214 = vmul.f32 %v1196, %v1210
        %v1215 = vmul.f32 %v1193, %v1206
        %v1216 = vmul.f32 %v1197, %v1210
        %v1217 = vmul.f32 %v1194, %v1206
        %v1218 = vmul.f32 %v1198, %v1210
        %v1219 = vmul.f32 %v1195, %v1206
        %v1220 = vmul.f32 %v1199, %v1210
        %v1221 = vadd.f32 %v1167, %v1213
        %v1222 = vadd.f32 %v1168, %v1214
        %v1223 = vadd.f32 %v1169, %v1215
        %v1224 = vadd.f32 %v1170, %v1216
        %v1225 = vadd.f32 %v1171, %v1217
        %v1226 = vadd.f32 %v1172, %v1218
        %v1227 = vadd.f32 %v1173, %v1219
        %v1228 = vadd.f32 %v1174, %v1220
        %1229 = vrot.lane.b32.xlu0 %v829, 112
        %v1230 = vpop.permute.xlu0 %1229
        %1231 = vrot.lane.b32.xlu0 %v835, 112
        %v1232 = vpop.permute.xlu0 %1231
        %1233 = vrot.lane.b32.xlu0 %v841, 112
        %v1234 = vpop.permute.xlu0 %1233
        %1235 = vrot.lane.b32.xlu0 %v847, 112
        %v1236 = vpop.permute.xlu0 %1235
        %1237 = vrot.lane.b32.xlu0 %v831, 112
        %v1238 = vpop.permute.xlu0 %1237
        %1239 = vrot.lane.b32.xlu0 %v837, 112
        %v1240 = vpop.permute.xlu0 %1239
        %1241 = vrot.lane.b32.xlu0 %v843, 112
        %v1242 = vpop.permute.xlu0 %1241
        %1243 = vrot.lane.b32.xlu0 %v849, 112
        %v1244 = vpop.permute.xlu0 %1243
        %vm1245 = vcmp.lt.s32.totalorder %v892, 112
        %v1246 = vsel %vm1245, %v1230, %v1238
        %v1247 = vsel %vm1245, %v1232, %v1240
        %v1248 = vsel %vm1245, %v1234, %v1242
        %v1249 = vsel %vm1245, %v1236, %v1244
        %v1250 = vsel %vm1245, %v1238, %v1230
        %v1251 = vsel %vm1245, %v1240, %v1232
        %v1252 = vsel %vm1245, %v1242, %v1234
        %v1253 = vsel %vm1245, %v1244, %v1236
        %s1254 = scalar_lea.vmem %s4, 14
        %v1255 = vld [vmem:[%s1254] sm:$0x3]
        %v1257 = vlaneseq
        %v1258 = vshrl.u32 %v1257, 7
        %v1259 = vsub.s32 0, %v1258
        %v1260 = vrot.slane %v1255, %v1259
        %v1261 = vlaneseq
        %v1262 = vshrl.u32 %v1261, 7
        %v1263 = vsub.s32 1, %v1262
        %v1264 = vrot.slane %v1255, %v1263
        %v1267 = vmul.f32 %v1246, %v1260
        %v1268 = vmul.f32 %v1250, %v1264
        %v1269 = vmul.f32 %v1247, %v1260
        %v1270 = vmul.f32 %v1251, %v1264
        %v1271 = vmul.f32 %v1248, %v1260
        %v1272 = vmul.f32 %v1252, %v1264
        %v1273 = vmul.f32 %v1249, %v1260
        %v1274 = vmul.f32 %v1253, %v1264
        %v1275 = vadd.f32 %v1221, %v1267
        %v1276 = vadd.f32 %v1222, %v1268
        %v1277 = vadd.f32 %v1223, %v1269
        %v1278 = vadd.f32 %v1224, %v1270
        %v1279 = vadd.f32 %v1225, %v1271
        %v1280 = vadd.f32 %v1226, %v1272
        %v1281 = vadd.f32 %v1227, %v1273
        %v1282 = vadd.f32 %v1228, %v1274
        %1283 = vrot.lane.b32.xlu0 %v853, 111
        %v1284 = vpop.permute.xlu0 %1283
        %1285 = vrot.lane.b32.xlu0 %v859, 111
        %v1286 = vpop.permute.xlu0 %1285
        %1287 = vrot.lane.b32.xlu0 %v865, 111
        %v1288 = vpop.permute.xlu0 %1287
        %1289 = vrot.lane.b32.xlu0 %v871, 111
        %v1290 = vpop.permute.xlu0 %1289
        %1291 = vrot.lane.b32.xlu0 %v855, 111
        %v1292 = vpop.permute.xlu0 %1291
        %1293 = vrot.lane.b32.xlu0 %v861, 111
        %v1294 = vpop.permute.xlu0 %1293
        %1295 = vrot.lane.b32.xlu0 %v867, 111
        %v1296 = vpop.permute.xlu0 %1295
        %1297 = vrot.lane.b32.xlu0 %v873, 111
        %v1298 = vpop.permute.xlu0 %1297
        %vm1299 = vcmp.lt.s32.totalorder %v892, 111
        %v1300 = vsel %vm1299, %v1284, %v1292
        %v1301 = vsel %vm1299, %v1286, %v1294
        %v1302 = vsel %vm1299, %v1288, %v1296
        %v1303 = vsel %vm1299, %v1290, %v1298
        %v1304 = vsel %vm1299, %v1292, %v1284
        %v1305 = vsel %vm1299, %v1294, %v1286
        %v1306 = vsel %vm1299, %v1296, %v1288
        %v1307 = vsel %vm1299, %v1298, %v1290
        %s1308 = scalar_lea.vmem %s4, 16
        %v1309 = vld [vmem:[%s1308] sm:$0x3]
        %v1311 = vlaneseq
        %v1312 = vshrl.u32 %v1311, 7
        %v1313 = vsub.s32 0, %v1312
        %v1314 = vrot.slane %v1309, %v1313
        %v1315 = vlaneseq
        %v1316 = vshrl.u32 %v1315, 7
        %v1317 = vsub.s32 1, %v1316
        %v1318 = vrot.slane %v1309, %v1317
        %v1321 = vmul.f32 %v1300, %v1314
        %v1322 = vmul.f32 %v1304, %v1318
        %v1323 = vmul.f32 %v1301, %v1314
        %v1324 = vmul.f32 %v1305, %v1318
        %v1325 = vmul.f32 %v1302, %v1314
        %v1326 = vmul.f32 %v1306, %v1318
        %v1327 = vmul.f32 %v1303, %v1314
        %v1328 = vmul.f32 %v1307, %v1318
        %v1329 = vadd.f32 %v1275, %v1321
        %v1330 = vadd.f32 %v1276, %v1322
        %v1331 = vadd.f32 %v1277, %v1323
        %v1332 = vadd.f32 %v1278, %v1324
        %v1333 = vadd.f32 %v1279, %v1325
        %v1334 = vadd.f32 %v1280, %v1326
        %v1335 = vadd.f32 %v1281, %v1327
        %v1336 = vadd.f32 %v1282, %v1328
        %v1337 = vld [vmem:[%s5] sm:$0xff]
        %v1338 = vld [vmem:[%s5 + $0x8] sm:$0xff]
        %v1339 = vld [vmem:[%s5 + $0x10] sm:$0xff]
        %v1340 = vld [vmem:[%s5 + $0x18] sm:$0xff]
        %1342 = vset.pattern.permute.xlu0 0
        %1343 = vperm.xlu0 %1342, %v1337
        %v1344 = vpop.permute.xlu0 %1343
        %1347 = vset.pattern.permute.xlu0 0
        %1348 = vperm.xlu0 %1347, %v1338
        %v1349 = vpop.permute.xlu0 %1348
        %1352 = vset.pattern.permute.xlu0 0
        %1353 = vperm.xlu0 %1352, %v1339
        %v1354 = vpop.permute.xlu0 %1353
        %1357 = vset.pattern.permute.xlu0 0
        %1358 = vperm.xlu0 %1357, %v1340
        %v1359 = vpop.permute.xlu0 %1358
        %v1361 = vadd.f32 %v1329, %v1344
        %v1362 = vadd.f32 %v1330, %v1344
        %v1363 = vadd.f32 %v1331, %v1349
        %v1364 = vadd.f32 %v1332, %v1349
        %v1365 = vadd.f32 %v1333, %v1354
        %v1366 = vadd.f32 %v1334, %v1354
        %v1367 = vadd.f32 %v1335, %v1359
        %v1368 = vadd.f32 %v1336, %v1359
        %v1369 = vmax.f32 %v1361, 0.0
        %v1370 = vmax.f32 %v1362, 0.0
        %v1371 = vmax.f32 %v1363, 0.0
        %v1372 = vmax.f32 %v1364, 0.0
        %v1373 = vmax.f32 %v1365, 0.0
        %v1374 = vmax.f32 %v1366, 0.0
        %v1375 = vmax.f32 %v1367, 0.0
        %v1376 = vmax.f32 %v1368, 0.0
        %v1377 = vld [vmem:[%s6] sm:$0xff]
        %v1378 = vld [vmem:[%s6 + $0x8] sm:$0xff]
        %v1379 = vld [vmem:[%s6 + $0x10] sm:$0xff]
        %v1380 = vld [vmem:[%s6 + $0x18] sm:$0xff]
        %v1381 = vld [vmem:[%s7] sm:$0xff]
        %v1382 = vld [vmem:[%s7 + $0x8] sm:$0xff]
        %v1383 = vld [vmem:[%s7 + $0x10] sm:$0xff]
        %v1384 = vld [vmem:[%s7 + $0x18] sm:$0xff]
        %1386 = vset.pattern.permute.xlu0 0
        %1387 = vperm.xlu0 %1386, %v1381
        %v1388 = vpop.permute.xlu0 %1387
        %1391 = vset.pattern.permute.xlu0 0
        %1392 = vperm.xlu0 %1391, %v1382
        %v1393 = vpop.permute.xlu0 %1392
        %1396 = vset.pattern.permute.xlu0 0
        %1397 = vperm.xlu0 %1396, %v1383
        %v1398 = vpop.permute.xlu0 %1397
        %1401 = vset.pattern.permute.xlu0 0
        %1402 = vperm.xlu0 %1401, %v1384
        %v1403 = vpop.permute.xlu0 %1402
        %v1406 = vsel %vm340, %v1377, 0
        %v1409 = vsel %vm340, %v1378, 0
        %v1412 = vsel %vm340, %v1379, 0
        %v1415 = vsel %vm340, %v1380, 0
        %1417 = vmatprep.subr.mxu0 %v1370
        %1418 = vmatpush1.msra.mxu0 %v1369
        %1419 = vmatprep.subr.mxu0 %v1372
        %1420 = vmatpush1.msra.mxu0 %v1371
        %1421 = vmatprep.subr.mxu0 %v1374
        %1422 = vmatpush1.msra.mxu0 %v1373
        %1423 = vmatprep.subr.mxu0 %v1376
        %1424 = vmatpush1.msra.mxu0 %v1375
        %1425 = vmatprep.subr.mxu0 0.0
        %1426 = vmatpush1.msra.mxu0 0.0
        %1427 = vmatprep.subr.mxu0 0.0
        %1428 = vmatpush1.msra.mxu0 0.0
        %1429 = vmatprep.subr.mxu0 0.0
        %1430 = vmatpush1.msra.mxu0 0.0
        %1431 = vmatprep.subr.mxu0 0.0
        %1432 = vmatpush1.msra.mxu0 0.0
        %1433 = vmatprep.subr.mxu0 0.0
        %1434 = vmatpush1.msra.mxu0 0.0
        %1435 = vmatprep.subr.mxu0 0.0
        %1436 = vmatpush1.msra.mxu0 0.0
        %1437 = vmatprep.subr.mxu0 0.0
        %1438 = vmatpush1.msra.mxu0 0.0
        %1439 = vmatprep.subr.mxu0 0.0
        %1440 = vmatpush1.msra.mxu0 0.0
        %1441 = vmatprep.subr.mxu0 0.0
        %1442 = vmatpush1.msra.mxu0 0.0
        %1443 = vmatprep.subr.mxu0 0.0
        %1444 = vmatpush1.msra.mxu0 0.0
        %1445 = vmatprep.subr.mxu0 0.0
        %1446 = vmatpush1.msra.mxu0 0.0
        %1447 = vmatprep.subr.mxu0 0.0
        %1448 = vmatpush1.msra.mxu0 0.0
        %1449 = vmatprep.subr.mxu0 0.0
        %1450 = vmatpush1.msra.mxu0 0.0
        %1451 = vmatprep.subr.mxu0 0.0
        %1452 = vmatpush1.msra.mxu0 0.0
        %1453 = vmatprep.subr.mxu0 0.0
        %1454 = vmatpush1.msra.mxu0 0.0
        %1455 = vmatprep.subr.mxu0 0.0
        %1456 = vmatpush1.msra.mxu0 0.0
        %1457 = vmatprep.subr.mxu0 0.0
        %1458 = vmatpush1.msra.mxu0 0.0
        %1459 = vmatprep.subr.mxu0 0.0
        %1460 = vmatpush1.msra.mxu0 0.0
        %1461 = vmatprep.subr.mxu0 0.0
        %1462 = vmatpush1.msra.mxu0 0.0
        %1463 = vmatprep.subr.mxu0 0.0
        %1464 = vmatpush1.msra.mxu0 0.0
        %1465 = vmatprep.subr.mxu0 0.0
        %1466 = vmatpush1.msra.mxu0 0.0
        %1467 = vmatprep.subr.mxu0 0.0
        %1468 = vmatpush1.msra.mxu0 0.0
        %1469 = vmatprep.subr.mxu0 0.0
        %1470 = vmatpush1.msra.mxu0 0.0
        %1471 = vmatprep.subr.mxu0 0.0
        %1472 = vmatpush1.msra.mxu0 0.0
        %1473 = vmatprep.subr.mxu0 0.0
        %1474 = vmatpush1.msra.mxu0 0.0
        %1475 = vmatprep.subr.mxu0 0.0
        %1476 = vmatpush1.msra.mxu0 0.0
        %1477 = vmatprep.subr.mxu0 0.0
        %1478 = vmatpush1.msra.mxu0 0.0
        %1479 = vmatprep.subr.mxu0 0.0
        %1480 = vmatpush1.msra.mxu0 0.0
        %1481 = vmatprep.mubr.f32.mxu0 0.0
        %1482 = vmatmul.mubr.f32.gmra.mrb[0].mxu0 %v1406
        %v1483 = vpop.f32.mrb[0].mxu0
        %v1484 = vadd.f32 %v1388, %v1483
        %v1485 = vpop.f32.mrb[0].mxu0
        %v1486 = vadd.f32 %v1388, %v1485
        %1487 = vmatprep.mubr.f32.mxu0 0.0
        %1488 = vmatmul.mubr.f32.gmra.mrb[0].mxu0 %v1409
        %v1489 = vpop.f32.mrb[0].mxu0
        %v1490 = vadd.f32 %v1393, %v1489
        %v1491 = vpop.f32.mrb[0].mxu0
        %v1492 = vadd.f32 %v1393, %v1491
        %1493 = vmatprep.mubr.f32.mxu0 0.0
        %1494 = vmatmul.mubr.f32.gmra.mrb[0].mxu0 %v1412
        %v1495 = vpop.f32.mrb[0].mxu0
        %v1496 = vadd.f32 %v1398, %v1495
        %v1497 = vpop.f32.mrb[0].mxu0
        %v1498 = vadd.f32 %v1398, %v1497
        %1499 = vmatprep.mubr.f32.mxu0 0.0
        %1500 = vmatmul.mubr.f32.gmra.mrb[0].mxu0 %v1415
        %v1501 = vpop.f32.mrb[0].mxu0
        %v1502 = vadd.f32 %v1403, %v1501
        %v1503 = vpop.f32.mrb[0].mxu0
        %v1504 = vadd.f32 %v1403, %v1503
        %1505 = vdwg.mxu0
        %v1506 = vadd.f32 %v1484, %v304
        %v1507 = vadd.f32 %v1486, %v305
        %v1508 = vadd.f32 %v1490, %v306
        %v1509 = vadd.f32 %v1492, %v307
        %v1510 = vadd.f32 %v1496, %v308
        %v1511 = vadd.f32 %v1498, %v309
        %v1512 = vadd.f32 %v1502, %v310
        %v1513 = vadd.f32 %v1504, %v311
        %v1514 = vmax.f32 %v1506, 0.0
        %v1515 = vmax.f32 %v1507, 0.0
        %v1516 = vmax.f32 %v1508, 0.0
        %v1517 = vmax.f32 %v1509, 0.0
        %v1518 = vmax.f32 %v1510, 0.0
        %v1519 = vmax.f32 %v1511, 0.0
        %v1520 = vmax.f32 %v1512, 0.0
        %v1521 = vmax.f32 %v1513, 0.0
        %1522 = vst [vmem:[%s298] sm:$0xff] %v1514
        %1523 = vst [vmem:[%s298 + $0x8] sm:$0xff] %v1515
        %1524 = vst [vmem:[%s298 + $0x10] sm:$0xff] %v1516
        %1525 = vst [vmem:[%s298 + $0x18] sm:$0xff] %v1517
        %1526 = vst [vmem:[%s298 + $0x20] sm:$0xff] %v1518
        %1527 = vst [vmem:[%s298 + $0x28] sm:$0xff] %v1519
        %1528 = vst [vmem:[%s298 + $0x30] sm:$0xff] %v1520
        %1529 = vst [vmem:[%s298 + $0x38] sm:$0xff] %v1521
        %s1530 = sand.u32 %s203, 1
        %s1531 = scalar_lea.sflag [#allocation3], %s1530
        %s1532 = sand.u32 %s203, 1
        %s1533 = smul.addr %s1532, 64
        %s1534 = scalar_lea.vmem [#allocation2], %s1533
        // Predicated region
        $region53: #{tpu_custom_call.1} parent=51 // pred_check
          %p1535 = pneg %p213
        $region54: #{tpu_custom_call.1} parent=51 // pred_check_branch
          %1537 = sbr.rel (%p1535) target = $region56
        $region55: #{tpu_custom_call.1} parent=51 // pred_region
          %s1539 = ssub.s32 1024, 1024
          %1540 = vsyncadd %s1531, %s1539
          %s1541 = smul.addr %s22, 8
          %s1542 = smul.addr %s1541, 128
          %s1543 = scalar_lea.hbm %s8, %s1542
          %s1544 = sshll.u32 %s1534, 4
          %s1545 = int_to_ptr.vmem [resolvable:$true] %s1544
          %1550 = dma.vmem_to_hbm [thread:$0]  %s1545, 1024, %s1543, %s1531, 256, 256, 16
        $region56: #{tpu_custom_call.1} parent=51 // pred_fallthru
          _
      $region52: #{tpu_custom_call.1} parent=5 // pred_fallthru
        _
      %p1551 = scmp.le.s32.totalorder 2, %s17
      // Predicated region
      $region57: #{tpu_custom_call.1} parent=5 // pred_check
        %p1552 = pneg %p1551
      $region58: #{tpu_custom_call.1} parent=5 // pred_check_branch
        %1554 = sbr.rel (%p1552) target = $region60
      $region59: #{tpu_custom_call.1} parent=5 // pred_region
        %s1555 = ssub.s32 %s17, 2
        // Predicated region
        $region61: #{tpu_custom_call.1} parent=59 // pred_check
          %p1556 = pneg %p219
        $region62: #{tpu_custom_call.1} parent=59 // pred_check_branch
          %1558 = sbr.rel (%p1556) target = $region64
        $region63: #{tpu_custom_call.1} parent=59 // pred_region
          %s1559 = sand.u32 %s204, 1
          %s1560 = scalar_lea.sflag [#allocation3], %s1559
          %s1561 = sand.u32 %s204, 1
          %s1562 = smul.addr %s1561, 64
          %s1563 = scalar_lea.vmem [#allocation2], %s1562
          %1564 = dma.done %s1560, 1024
        $region64: #{tpu_custom_call.1} parent=59 // pred_fallthru
          _
      $region60: #{tpu_custom_call.1} parent=5 // pred_fallthru
        _
    $region6: #{tpu_custom_call.1} parent=1 // loop_footer
      %s21 = sadd.s32 1, %s17
    $region7: #{tpu_custom_call.1} parent=1 // loop_footer_branch
      %16 = sbr.rel target = $region3
    $region8: #{tpu_custom_call.1} parent=1 // loop_exit
      _
    %1565 = vsyncpa [#allocation3], 1
    %s1566 = scalar_lea.sflag [#allocation3], 1
    %1567 = vsyncpa %s1566, 1

</llo_original>
